<compile_context>
chip_gen: v6e
topology: v6e:2x2x1
jax: 0.10.0
libtpu: 0.0.40
codegen_flags: <defaults>
</compile_context>

<pallas_src>
import functools

import jax
import jax.numpy as jnp
from jax import lax
from jax.experimental import pallas as pl
from jax.experimental.pallas import tpu as pltpu


def _scores_and_costs(im_ref, s_ref, dcol_ref, drow_ref, block_n):
    """MXU tile matmul + margin-folded hinge costs (shared by both kernels)."""
    j = pl.program_id(1)
    scores = lax.dot_general(
        im_ref[...], s_ref[...],
        dimension_numbers=(((1,), (1,)), ((), ())),
        preferred_element_type=jnp.float32)              # (block_m, block_n) f32

    # Resident (1, N) diag row; slice the current column window in-kernel.
    if block_n == drow_ref.shape[1]:
        drow = drow_ref[...]                             # nj == 1: whole row
    else:
        col_start = j * block_n
        if block_n % 128 == 0:
            col_start = pl.multiple_of(col_start, 128)
        drow = drow_ref[:, pl.ds(col_start, block_n)]    # (1, block_n)

    # margin is already folded into dcol/drow (= diag - margin).
    cost_s = jnp.maximum(scores - dcol_ref[...], 0.0)    # subtract diag[row]
    cost_im = jnp.maximum(scores - drow, 0.0)            # subtract diag[col]
    return cost_s, cost_im


def _sum_kernel(im_ref, s_ref, dcol_ref, drow_ref, out_ref, *, block_m, block_n):
    i = pl.program_id(0)
    j = pl.program_id(1)

    cost_s, cost_im = _scores_and_costs(im_ref, s_ref, dcol_ref, drow_ref, block_n)
    cost = cost_s + cost_im

    @pl.when(j == 0)
    def _init():
        out_ref[...] = jnp.zeros_like(out_ref)

    r0 = i * block_m
    c0 = j * block_n
    has_diag = jnp.logical_and(r0 < c0 + block_n, c0 < r0 + block_m)

    @pl.when(has_diag)
    def _acc_masked():
        rows = lax.broadcasted_iota(jnp.int32, (block_m, block_n), 0) + r0
        cols = lax.broadcasted_iota(jnp.int32, (block_m, block_n), 1) + c0
        masked = jnp.where(rows == cols, 0.0, cost)
        out_ref[...] += jnp.sum(masked, axis=1, keepdims=True)

    @pl.when(jnp.logical_not(has_diag))
    def _acc():
        out_ref[...] += jnp.sum(cost, axis=1, keepdims=True)


def _max_kernel(im_ref, s_ref, dcol_ref, drow_ref, rowmax_ref, colmax_ref, *,
                block_m, block_n):
    i = pl.program_id(0)
    j = pl.program_id(1)

    cost_s, cost_im = _scores_and_costs(im_ref, s_ref, dcol_ref, drow_ref, block_n)

    r0 = i * block_m
    c0 = j * block_n
    has_diag = jnp.logical_and(r0 < c0 + block_n, c0 < r0 + block_m)

    def _emit(cs, ci):
        row_part = jnp.max(cs, axis=1, keepdims=True)    # (block_m, 1)
        col_part = jnp.max(ci, axis=0, keepdims=True)    # (1, block_n)

        @pl.when(j == 0)
        def _init_rows():
            rowmax_ref[...] = row_part

        @pl.when(j > 0)
        def _acc_rows():
            rowmax_ref[...] = jnp.maximum(rowmax_ref[...], row_part)

        # Per-(row-tile, col-tile) partial column maxima; finished in wrapper,
        # so there is no cross-i dependency (i stays megacore-parallel).
        colmax_ref[...] = col_part.reshape(1, 1, 1, block_n)

    @pl.when(has_diag)
    def _diag_tile():
        rows = lax.broadcasted_iota(jnp.int32, (block_m, block_n), 0) + r0
        cols = lax.broadcasted_iota(jnp.int32, (block_m, block_n), 1) + c0
        on_diag = rows == cols
        _emit(jnp.where(on_diag, 0.0, cost_s), jnp.where(on_diag, 0.0, cost_im))

    @pl.when(jnp.logical_not(has_diag))
    def _off_diag_tile():
        _emit(cost_s, cost_im)


def _pick_divisor(n, candidates):
    for cand in candidates:
        if n % cand == 0:
            return cand
    return n  # small / ragged N: one whole-axis tile


def _vmem_capacity_bytes():
    try:
        info = pltpu.get_tpu_info()
        cap = getattr(info, "vmem_capacity_bytes", None)
        if cap:
            return int(cap)
    except Exception:
        pass
    return 128 * 1024 * 1024


def contrastive_loss(im, s, margin=0.0, max_violation=False,
                     block_m=None, block_n=None):
    """Pallas TPU forward of ContrastiveLoss (sim=dot). im, s: (N, D) -> scalar."""
    assert im.ndim == 2 and im.shape == s.shape
    n, d = im.shape
    itemsize = jnp.dtype(im.dtype).itemsize
    vmem_cap = _vmem_capacity_bytes()

    if block_m is None:
        block_m = _pick_divisor(n, (256, 128))
    if block_n is None:
        # Keep the whole `s` VMEM-resident (nj == 1) when it fits comfortably.
        resident_cost = (2 * n * d * itemsize          # s (budget double-buffer)
                         + 2 * block_m * d * itemsize  # im tiles
                         + 6 * block_m * n * 4         # f32 temporaries
                         + 16 * n * 4)                 # diag + outputs
        block_n = n if resident_cost <= 0.6 * vmem_cap else _pick_divisor(
            n, (512, 256, 128))
    assert n % block_m == 0 and n % block_n == 0
    ni, nj = n // block_m, n // block_n

    # O(N*D) diagonal with f32 accumulation (no f32 copies of im/s in HBM),
    # with the margin folded in so the kernel does max(scores - d, 0) directly.
    diag = jnp.einsum("nd,nd->n", im, s, preferred_element_type=jnp.float32)
    diag_m = diag - jnp.asarray(margin, dtype=jnp.float32)
    d_col = diag_m.reshape(n, 1)          # consumed as (block_m, 1) per row tile
    d_row = diag_m.reshape(1, n)          # VMEM-resident, sliced in-kernel

    # VMEM budget, capped to ~80% of this generation's physical VMEM.
    vmem_need = (2 * block_m * d * itemsize + 2 * block_n * d * itemsize
                 + 2 * block_m * 4 + 8 * n * 4
                 + 4 * block_m * block_n * 4
                 + 2 * (block_m * 128 + block_n) * 4 + 4096)
    vmem_limit = int(min(max(2 * vmem_need, 16 * 1024 * 1024),
                         int(0.8 * vmem_cap)))

    in_specs = [
        pl.BlockSpec((block_m, d), lambda i, j: (i, 0)),   # im row tile
        pl.BlockSpec((block_n, d), lambda i, j: (j, 0)),   # s col tile (resident if nj==1)
        pl.BlockSpec((block_m, 1), lambda i, j: (i, 0)),   # diag - margin (rows)
        pl.BlockSpec((1, n), lambda i, j: (0, 0)),         # diag - margin (resident row)
    ]
    compiler_params = pltpu.CompilerParams(
        dimension_semantics=("parallel", "arbitrary"),
        vmem_limit_bytes=vmem_limit,
    )

    if not max_violation:
        kernel = functools.partial(_sum_kernel, block_m=block_m, block_n=block_n)
        rowsum = pl.pallas_call(
            kernel,
            out_shape=jax.ShapeDtypeStruct((n, 1), jnp.float32),
            grid_spec=pltpu.PrefetchScalarGridSpec(
                num_scalar_prefetch=0,
                grid=(ni, nj),
                in_specs=in_specs,
                out_specs=pl.BlockSpec((block_m, 1), lambda i, j: (i, 0)),
            ),
            compiler_params=compiler_params,
        )(im, s, d_col, d_row)
        return jnp.sum(rowsum)

    kernel = functools.partial(_max_kernel, block_m=block_m, block_n=block_n)
    rowmax, colmax = pl.pallas_call(
        kernel,
        out_shape=(
            jax.ShapeDtypeStruct((n, 1), jnp.float32),
            jax.ShapeDtypeStruct((ni, nj, 1, block_n), jnp.float32),
        ),
        grid_spec=pltpu.PrefetchScalarGridSpec(
            num_scalar_prefetch=0,
            grid=(ni, nj),
            in_specs=in_specs,
            out_specs=(
                pl.BlockSpec((block_m, 1), lambda i, j: (i, 0)),
                pl.BlockSpec((1, 1, 1, block_n), lambda i, j: (i, j, 0, 0)),
            ),
        ),
        compiler_params=compiler_params,
    )(im, s, d_col, d_row)

    # Finish column maxima across row tiles on the host side (O(ni * N)).
    col_partials = colmax.reshape(ni, n)                 # (ni, N)
    return jnp.sum(rowmax) + jnp.sum(jnp.max(col_partials, axis=0))


def _reference_loss(im, s, margin=0.0, max_violation=False):
    """Pure-JAX port of the PyTorch module (ground truth for testing)."""
    scores = jnp.dot(im.astype(jnp.float32), s.astype(jnp.float32).T)
    diagonal = jnp.diag(scores)[:, None]
    cost_s = jnp.maximum(margin + scores - diagonal, 0.0)
    cost_im = jnp.maximum(margin + scores - diagonal.T, 0.0)
    eye = jnp.eye(scores.shape[0], dtype=bool)
    cost_s = jnp.where(eye, 0.0, cost_s)
    cost_im = jnp.where(eye, 0.0, cost_im)
    if max_violation:
        cost_s = jnp.max(cost_s, axis=1)
        cost_im = jnp.max(cost_im, axis=0)
    return jnp.sum(cost_s) + jnp.sum(cost_im)


if __name__ == "__main__":
    key = jax.random.PRNGKey(0)
    k_im, k_s = jax.random.split(key)

    # Small integer-valued embeddings: every score is exactly representable, so
    # the kernel/reference comparison is not polluted by matmul precision.
    N, D = 384, 64
    im = jax.random.randint(k_im, (N, D), -3, 4).astype(jnp.float32)
    s = jax.random.randint(k_s, (N, D), -3, 4).astype(jnp.float32)

    configs = [
        dict(margin=0.0, max_violation=False),
        dict(margin=2.0, max_violation=False),
        dict(margin=2.0, max_violation=True),
    ]
    for cfg in configs:
        want = _reference_loss(im, s, **cfg)

        # Default tiling: s VMEM-resident (single column tile).
        got = jax.block_until_ready(contrastive_loss(im, s, **cfg))
        assert jnp.allclose(got, want, rtol=1e-4, atol=1.0), ("resident", cfg, got, want)

        # Forced multi-column-tile path (exercises nj > 1, off-diagonal tiles,
        # in-kernel diag-row slicing, per-tile column-max partials).
        got2 = jax.block_until_ready(
            contrastive_loss(im, s, block_m=128, block_n=128, **cfg))
        assert jnp.allclose(got2, want, rtol=1e-4, atol=1.0), ("tiled", cfg, got2, want)

    print("KERNEL_OK")
</pallas_src>

<mosaic_0001>
module attributes {stable_mosaic.version = 11 : i64} {
  func.func @_sum_kernel(%arg0: i32, %arg1: i32, %arg2: memref<128x64xf32, #tpu.memory_space<vmem>>, %arg3: memref<384x64xf32, #tpu.memory_space<vmem>>, %arg4: memref<128x1xf32, #tpu.memory_space<vmem>>, %arg5: memref<1x384xf32, #tpu.memory_space<vmem>>, %arg6: memref<128x1xf32, #tpu.memory_space<vmem>>) attributes {dimension_semantics = [#tpu.dimension_semantics<parallel>, #tpu.dimension_semantics<arbitrary>], iteration_bounds = array<i64: 3, 1>, scalar_prefetch = 0 : i64, scratch_operands = 0 : i64, tpu.core_type = #tpu.core_type<tc>, window_params = [{transform_indices = @transform_0, window_bounds = array<i64: 128, 64>}, {transform_indices = @transform_1, window_bounds = array<i64: 384, 64>}, {transform_indices = @transform_2, window_bounds = array<i64: 128, 1>}, {pipeline_mode = #tpu.pipeline_mode<synchronous>, transform_indices = @transform_3, window_bounds = array<i64: 1, 384>}, {transform_indices = @transform_4, window_bounds = array<i64: 128, 1>}]} {
    %c0 = arith.constant 0 : index
    %c0_0 = arith.constant 0 : index
    %0 = vector.load %arg2[%c0, %c0_0] : memref<128x64xf32, #tpu.memory_space<vmem>>, vector<128x64xf32>
    %c0_1 = arith.constant 0 : index
    %c0_2 = arith.constant 0 : index
    %1 = vector.load %arg3[%c0_1, %c0_2] : memref<384x64xf32, #tpu.memory_space<vmem>>, vector<384x64xf32>
    %cst = arith.constant dense<0.000000e+00> : vector<128x384xf32>
    %2 = tpu.matmul %0, %1, %cst {dimension_numbers = #tpu.dot_dimension_numbers<[1], [1], [0], [0], [0, 0, 1, 0], [], []>} : vector<128x64xf32>, vector<384x64xf32>, vector<128x384xf32> -> vector<128x384xf32>
    %c0_3 = arith.constant 0 : index
    %c0_4 = arith.constant 0 : index
    %3 = vector.load %arg5[%c0_3, %c0_4] : memref<1x384xf32, #tpu.memory_space<vmem>>, vector<1x384xf32>
    %c0_5 = arith.constant 0 : index
    %c0_6 = arith.constant 0 : index
    %4 = vector.load %arg4[%c0_5, %c0_6] : memref<128x1xf32, #tpu.memory_space<vmem>>, vector<128x1xf32>
    %5 = vector.broadcast %4 : vector<128x1xf32> to vector<128x384xf32>
    %6 = arith.subf %2, %5 : vector<128x384xf32>
    %cst_7 = arith.constant 0.000000e+00 : f32
    %7 = vector.broadcast %cst_7 : f32 to vector<128x384xf32>
    %8 = arith.maximumf %6, %7 : vector<128x384xf32>
    %9 = vector.broadcast %3 : vector<1x384xf32> to vector<128x384xf32>
    %10 = arith.subf %2, %9 : vector<128x384xf32>
    %cst_8 = arith.constant 0.000000e+00 : f32
    %11 = vector.broadcast %cst_8 : f32 to vector<128x384xf32>
    %12 = arith.maximumf %10, %11 : vector<128x384xf32>
    %13 = arith.addf %8, %12 : vector<128x384xf32>
    %c0_i32 = arith.constant 0 : i32
    %14 = arith.cmpi eq, %arg1, %c0_i32 : i32
    %15 = arith.extui %14 : i1 to i32
    %c0_i32_9 = arith.constant 0 : i32
    %16 = arith.cmpi ne, %15, %c0_i32_9 : i32
    scf.if %16 {
      %cst_14 = arith.constant 0.000000e+00 : f32
      %29 = vector.broadcast %cst_14 : f32 to vector<128x1xf32>
      %c0_15 = arith.constant 0 : index
      %c0_16 = arith.constant 0 : index
      %30 = vector.load %arg6[%c0_15, %c0_16] : memref<128x1xf32, #tpu.memory_space<vmem>>, vector<128x1xf32>
      tpu.vector_store %arg6[%c0_15, %c0_16], %29 {strides = array<i32>} : memref<128x1xf32, #tpu.memory_space<vmem>>, vector<128x1xf32>,
    } else {
    }
    %c128_i32 = arith.constant 128 : i32
    %17 = arith.muli %arg0, %c128_i32 : i32
    %c384_i32 = arith.constant 384 : i32
    %18 = arith.muli %arg1, %c384_i32 : i32
    %c384_i32_10 = arith.constant 384 : i32
    %19 = arith.addi %18, %c384_i32_10 : i32
    %20 = arith.cmpi slt, %17, %19 : i32
    %c128_i32_11 = arith.constant 128 : i32
    %21 = arith.addi %17, %c128_i32_11 : i32
    %22 = arith.cmpi slt, %18, %21 : i32
    %23 = arith.andi %20, %22 : i1
    %24 = arith.extui %23 : i1 to i32
    %c0_i32_12 = arith.constant 0 : i32
    %25 = arith.cmpi ne, %24, %c0_i32_12 : i32
    scf.if %25 {
      %29 = tpu.iota {dimensions = array<i32: 0>} : vector<128x384xi32>
      %30 = vector.broadcast %17 : i32 to vector<128x384xi32>
      %31 = arith.addi %29, %30 : vector<128x384xi32>
      %32 = tpu.iota {dimensions = array<i32: 1>} : vector<128x384xi32>
      %33 = vector.broadcast %18 : i32 to vector<128x384xi32>
      %34 = arith.addi %32, %33 : vector<128x384xi32>
      %35 = arith.cmpi eq, %31, %34 : vector<128x384xi32>
      %cst_14 = arith.constant 0.000000e+00 : f32
      %36 = vector.broadcast %cst_14 : f32 to vector<128x384xf32>
      %37 = arith.select %35, %36, %13 : vector<128x384xi1>, vector<128x384xf32>
      %c0_15 = arith.constant 0 : index
      %c0_16 = arith.constant 0 : index
      %38 = vector.load %arg6[%c0_15, %c0_16] : memref<128x1xf32, #tpu.memory_space<vmem>>, vector<128x1xf32>
      %cst_17 = arith.constant dense<0.000000e+00> : vector<128xf32>
      %39 = vector.multi_reduction <add>, %37, %cst_17 [1] : vector<128x384xf32> to vector<128xf32>
      %40 = vector.shape_cast %39 : vector<128xf32> to vector<128x1xf32>
      %41 = arith.addf %38, %40 : vector<128x1xf32>
      %c0_18 = arith.constant 0 : index
      %c0_19 = arith.constant 0 : index
      %42 = vector.load %arg6[%c0_18, %c0_19] : memref<128x1xf32, #tpu.memory_space<vmem>>, vector<128x1xf32>
      tpu.vector_store %arg6[%c0_18, %c0_19], %41 {strides = array<i32>} : memref<128x1xf32, #tpu.memory_space<vmem>>, vector<128x1xf32>,
    } else {
    }
    %true = arith.constant true
    %26 = arith.xori %23, %true : i1
    %27 = arith.extui %26 : i1 to i32
    %c0_i32_13 = arith.constant 0 : i32
    %28 = arith.cmpi ne, %27, %c0_i32_13 : i32
    scf.if %28 {
      %c0_14 = arith.constant 0 : index
      %c0_15 = arith.constant 0 : index
      %29 = vector.load %arg6[%c0_14, %c0_15] : memref<128x1xf32, #tpu.memory_space<vmem>>, vector<128x1xf32>
      %cst_16 = arith.constant dense<0.000000e+00> : vector<128xf32>
      %30 = vector.multi_reduction <add>, %13, %cst_16 [1] : vector<128x384xf32> to vector<128xf32>
      %31 = vector.shape_cast %30 : vector<128xf32> to vector<128x1xf32>
      %32 = arith.addf %29, %31 : vector<128x1xf32>
      %c0_17 = arith.constant 0 : index
      %c0_18 = arith.constant 0 : index
      %33 = vector.load %arg6[%c0_17, %c0_18] : memref<128x1xf32, #tpu.memory_space<vmem>>, vector<128x1xf32>
      tpu.vector_store %arg6[%c0_17, %c0_18], %32 {strides = array<i32>} : memref<128x1xf32, #tpu.memory_space<vmem>>, vector<128x1xf32>,
    } else {
    }
    return
  }
  func.func @transform_0(%arg0: i32, %arg1: i32) -> (i32, i32) {
    %c0_i32 = arith.constant 0 : i32
    %c0_i32_0 = arith.constant 0 : i32
    return %arg0, %c0_i32 : i32, i32
  }
  func.func @transform_1(%arg0: i32, %arg1: i32) -> (i32, i32) {
    %c0_i32 = arith.constant 0 : i32
    %c0_i32_0 = arith.constant 0 : i32
    return %arg1, %c0_i32 : i32, i32
  }
  func.func @transform_2(%arg0: i32, %arg1: i32) -> (i32, i32) {
    %c0_i32 = arith.constant 0 : i32
    %c0_i32_0 = arith.constant 0 : i32
    return %arg0, %c0_i32 : i32, i32
  }
  func.func @transform_3(%arg0: i32, %arg1: i32) -> (i32, i32) {
    %c0_i32 = arith.constant 0 : i32
    %c0_i32_0 = arith.constant 0 : i32
    %c0_i32_1 = arith.constant 0 : i32
    return %c0_i32, %c0_i32_0 : i32, i32
  }
  func.func @transform_4(%arg0: i32, %arg1: i32) -> (i32, i32) {
    %c0_i32 = arith.constant 0 : i32
    %c0_i32_0 = arith.constant 0 : i32
    return %arg0, %c0_i32 : i32, i32
  }
}

</mosaic_0001>

<llo_original>
// kernel: tpu_custom_call.1
$region0: #{tpu_custom_call.1}
  #allocation0 [shape = 'u32[]', space=smem, size = 0x4, offset = 0x4, fixed_abs, tag = 'smem constant byte address 0x4 - core index']
  #allocation1 [shape = 'u32[144,128]{1,0:T(1,128)}', space=vmem, size = 0x12000, scoped, tag = 'internal scratch']
  %s0 = inlined_call_operand.vmem [shape: f32[384,64], index: 0, kind: input, shape index: {}]
  %s1 = inlined_call_operand.vmem [shape: f32[384,64], index: 1, kind: input, shape index: {}]
  %s2 = inlined_call_operand.vmem [shape: f32[384,1], index: 2, kind: input, shape index: {}]
  %s3 = inlined_call_operand.vmem [shape: f32[1,384], index: 3, kind: input, shape index: {}]
  %s4 = inlined_call_operand.vmem [shape: f32[384,1], index: 4, kind: output, shape index: {}]
  %s5 = sld [smem:[#allocation0]]
  $region61: #{tpu_custom_call.1} parent=0
    _
  %s7 = ssub.s32 1, %s5
  %s8 = scalar_select 0, %s7, %s5
  loop: start=0, step=1, limit=5
  $region2: #{tpu_custom_call.1} parent=0 // loop_pre_header
    _
  $region3: #{tpu_custom_call.1} parent=0 // loop_header
    %s10 = sphi 0, %s14
    %p11 = scmp.ge.s32.totalorder %s10, 5
    %s17 = sphi 0, %s29
    %s18 = sphi 0, %s25
    %s19 = sphi 0, %s17
    %s20 = sphi 0, %s18
    %s21 = sphi 0, %s19
    %s22 = sphi 0, %s20
    %s32 = sphi 0, %s34
    %s35 = sphi 0, %s32
    %s36 = sphi 0, %s35
    %s52 = sphi 0, %s36
    %s58 = sphi 0, %s60
    %s61 = sphi 0, %s58
    %s62 = sphi 0, %s61
    %s78 = sphi 0, %s62
    %s84 = sphi 0, %s86
    %s87 = sphi 0, %s84
    %s88 = sphi 0, %s87
    %s104 = sphi 0, %s88
    %s108 = sphi 0, %s108
    %s110 = sphi 0, %s108
    %s111 = sphi 0, %s110
    %s125 = sphi 0, %s111
    %s131 = sphi 0, %s133
    %s134 = sphi 0, %s131
    %s135 = sphi 0, %s134
    %s151 = sphi 0, %s135
  $region4: #{tpu_custom_call.1} parent=0 // loop_header_branch
    %13 = sbr.rel (%p11) target = $region8
  $region5: #{tpu_custom_call.1} parent=0 // loop_body
    %s15 = ssub.s32 %s10, 1
    %s16 = ssub.s32 %s10, 2
    %s23 = sadd.s32 1, %s18
    %p24 = scmp.ge.s32.totalorder %s23, 1
    %s25 = scalar_select %p24, 0, %s23
    %s26 = sadd.s32 1, %s17
    %s27 = scalar_select %p24, %s26, %s17
    %p28 = scmp.ge.s32.totalorder %s27, 3
    %s29 = scalar_select %p28, 0, %s27
    %s30 = ssub.s32 %s17, %s29
    %p31 = scmp.eq.s32.totalorder %s30, 0
    %s33 = sadd.s32 %s32, 1
    %s34 = scalar_select %p31, %s32, %s33
    %p37 = pneg %p31
    %p38 = scmp.eq.s32.totalorder %s10, 2
    %p39 = por %p37, %p38
    %p40 = scmp.ne.s32.totalorder %s32, %s35
    %p41 = scmp.eq.s32.totalorder %s10, 0
    %p42 = por %p40, %p41
    %p43 = scmp.ne.s32.totalorder %s32, %s35
    %p44 = scmp.eq.s32.totalorder %s15, 2
    %p45 = por %p43, %p44
    %p46 = scmp.ne.s32.totalorder %s35, %s36
    %p47 = scmp.eq.s32.totalorder %s15, 0
    %p48 = por %p46, %p47
    %p49 = scmp.ne.s32.totalorder %s35, %s36
    %p50 = scmp.eq.s32.totalorder %s16, 2
    %p51 = por %p49, %p50
    %p53 = scmp.ne.s32.totalorder %s36, %s52
    %p54 = scmp.eq.s32.totalorder %s16, 0
    %p55 = por %p53, %p54
    %s56 = ssub.s32 %s18, %s25
    %p57 = scmp.eq.s32.totalorder %s56, 0
    %s59 = sadd.s32 %s58, 1
    %s60 = scalar_select %p57, %s58, %s59
    %p63 = pneg %p57
    %p64 = scmp.eq.s32.totalorder %s10, 2
    %p65 = por %p63, %p64
    %p66 = scmp.ne.s32.totalorder %s58, %s61
    %p67 = scmp.eq.s32.totalorder %s10, 0
    %p68 = por %p66, %p67
    %p69 = scmp.ne.s32.totalorder %s58, %s61
    %p70 = scmp.eq.s32.totalorder %s15, 2
    %p71 = por %p69, %p70
    %p72 = scmp.ne.s32.totalorder %s61, %s62
    %p73 = scmp.eq.s32.totalorder %s15, 0
    %p74 = por %p72, %p73
    %p75 = scmp.ne.s32.totalorder %s61, %s62
    %p76 = scmp.eq.s32.totalorder %s16, 2
    %p77 = por %p75, %p76
    %p79 = scmp.ne.s32.totalorder %s62, %s78
    %p80 = scmp.eq.s32.totalorder %s16, 0
    %p81 = por %p79, %p80
    %s82 = ssub.s32 %s17, %s29
    %p83 = scmp.eq.s32.totalorder %s82, 0
    %s85 = sadd.s32 %s84, 1
    %s86 = scalar_select %p83, %s84, %s85
    %p89 = pneg %p83
    %p90 = scmp.eq.s32.totalorder %s10, 2
    %p91 = por %p89, %p90
    %p92 = scmp.ne.s32.totalorder %s84, %s87
    %p93 = scmp.eq.s32.totalorder %s10, 0
    %p94 = por %p92, %p93
    %p95 = scmp.ne.s32.totalorder %s84, %s87
    %p96 = scmp.eq.s32.totalorder %s15, 2
    %p97 = por %p95, %p96
    %p98 = scmp.ne.s32.totalorder %s87, %s88
    %p99 = scmp.eq.s32.totalorder %s15, 0
    %p100 = por %p98, %p99
    %p101 = scmp.ne.s32.totalorder %s87, %s88
    %p102 = scmp.eq.s32.totalorder %s16, 2
    %p103 = por %p101, %p102
    %p105 = scmp.ne.s32.totalorder %s88, %s104
    %p106 = scmp.eq.s32.totalorder %s16, 0
    %p107 = por %p105, %p106
    %s109 = sadd.s32 %s108, 1
    %p112 = scmp.eq.s32.totalorder %s10, 2
    %p113 = scmp.ne.s32.totalorder %s108, %s110
    %p114 = scmp.eq.s32.totalorder %s10, 0
    %p115 = por %p113, %p114
    %p116 = scmp.ne.s32.totalorder %s108, %s110
    %p117 = scmp.eq.s32.totalorder %s15, 2
    %p118 = por %p116, %p117
    %p119 = scmp.ne.s32.totalorder %s110, %s111
    %p120 = scmp.eq.s32.totalorder %s15, 0
    %p121 = por %p119, %p120
    %p122 = scmp.ne.s32.totalorder %s110, %s111
    %p123 = scmp.eq.s32.totalorder %s16, 2
    %p124 = por %p122, %p123
    %p126 = scmp.ne.s32.totalorder %s111, %s125
    %p127 = scmp.eq.s32.totalorder %s16, 0
    %p128 = por %p126, %p127
    %s129 = ssub.s32 %s17, %s29
    %p130 = scmp.eq.s32.totalorder %s129, 0
    %s132 = sadd.s32 %s131, 1
    %s133 = scalar_select %p130, %s131, %s132
    %p136 = pneg %p130
    %p137 = scmp.eq.s32.totalorder %s10, 2
    %p138 = por %p136, %p137
    %p139 = scmp.ne.s32.totalorder %s131, %s134
    %p140 = scmp.eq.s32.totalorder %s10, 0
    %p141 = por %p139, %p140
    %p142 = scmp.ne.s32.totalorder %s131, %s134
    %p143 = scmp.eq.s32.totalorder %s15, 2
    %p144 = por %p142, %p143
    %p145 = scmp.ne.s32.totalorder %s134, %s135
    %p146 = scmp.eq.s32.totalorder %s15, 0
    %p147 = por %p145, %p146
    %p148 = scmp.ne.s32.totalorder %s134, %s135
    %p149 = scmp.eq.s32.totalorder %s16, 2
    %p150 = por %p148, %p149
    %p152 = scmp.ne.s32.totalorder %s135, %s151
    %p153 = scmp.eq.s32.totalorder %s16, 0
    %p154 = por %p152, %p153
    %p155 = scmp.le.s32.totalorder 1, %s10
    %p156 = scmp.lt.s32.totalorder %s10, 4
    %p157 = pnand %p155, %p156
    %p158 = pneg %p157
    // Predicated region
    $region9: #{tpu_custom_call.1} parent=5 // pred_check
      _
    $region10: #{tpu_custom_call.1} parent=5 // pred_check_branch
      %160 = sbr.rel (%p157) target = $region12
    $region11: #{tpu_custom_call.1} parent=5 // pred_region
      %s161 = ssub.s32 %s10, 1
      // Predicated region
      $region13: #{tpu_custom_call.1} parent=11 // pred_check
        %p162 = pneg %p74
      $region14: #{tpu_custom_call.1} parent=11 // pred_check_branch
        %164 = sbr.rel (%p162) target = $region16
      $region15: #{tpu_custom_call.1} parent=11 // pred_region
        %s165 = smul.u32 48, %s20
        %p166 = scmp.lt.s32.totalorder %s165, 47
        %s167 = scalar_select %p166, %s165, 47
        %s168 = smul.addr %s167, 8
        %s169 = scalar_lea.vmem %s1, %s168
        %s170 = smul.u32 48, %s20
      $region16: #{tpu_custom_call.1} parent=11 // pred_fallthru
        _
      // Predicated region
      $region17: #{tpu_custom_call.1} parent=11 // pred_check
        %p171 = pneg %p121
      $region18: #{tpu_custom_call.1} parent=11 // pred_check_branch
        %173 = sbr.rel (%p171) target = $region20
      $region19: #{tpu_custom_call.1} parent=11 // pred_region
        _
      $region20: #{tpu_custom_call.1} parent=11 // pred_fallthru
        _
    $region12: #{tpu_custom_call.1} parent=5 // pred_fallthru
      _
    %p174 = scmp.lt.s32.totalorder %s10, 3
    // Predicated region
    $region21: #{tpu_custom_call.1} parent=5 // pred_check
      %p175 = pneg %p174
    $region22: #{tpu_custom_call.1} parent=5 // pred_check_branch
      %177 = sbr.rel (%p175) target = $region24
    $region23: #{tpu_custom_call.1} parent=5 // pred_region
      // Predicated region
      $region25: #{tpu_custom_call.1} parent=23 // pred_check
        %p178 = pneg %p42
      $region26: #{tpu_custom_call.1} parent=23 // pred_check_branch
        %180 = sbr.rel (%p178) target = $region28
      $region27: #{tpu_custom_call.1} parent=23 // pred_region
        %s181 = smul.u32 16, %s17
        %p182 = scmp.lt.s32.totalorder %s181, 47
        %s183 = scalar_select %p182, %s181, 47
        %s184 = smul.addr %s183, 8
        %s185 = scalar_lea.vmem %s0, %s184
        %s186 = smul.u32 16, %s17
      $region28: #{tpu_custom_call.1} parent=23 // pred_fallthru
        _
      // Predicated region
      $region29: #{tpu_custom_call.1} parent=23 // pred_check
        %p187 = pneg %p94
      $region30: #{tpu_custom_call.1} parent=23 // pred_check_branch
        %189 = sbr.rel (%p187) target = $region32
      $region31: #{tpu_custom_call.1} parent=23 // pred_region
        %s190 = smul.u32 16, %s17
        %p191 = scmp.lt.s32.totalorder %s190, 47
        %s192 = scalar_select %p191, %s190, 47
        %s193 = smul.addr %s192, 8
        %s194 = scalar_lea.vmem %s2, %s193
        %s195 = smul.u32 16, %s17
      $region32: #{tpu_custom_call.1} parent=23 // pred_fallthru
        _
    $region24: #{tpu_custom_call.1} parent=5 // pred_fallthru
      _
    %p196 = scmp.le.s32.totalorder 1, %s10
    %p197 = scmp.lt.s32.totalorder %s10, 4
    %p198 = pnand %p196, %p197
    %p199 = pneg %p198
    // Predicated region
    $region33: #{tpu_custom_call.1} parent=5 // pred_check
      _
    $region34: #{tpu_custom_call.1} parent=5 // pred_check_branch
      %201 = sbr.rel (%p198) target = $region36
    $region35: #{tpu_custom_call.1} parent=5 // pred_region
      %s202 = ssub.s32 %s10, 1
      %s203 = smul.u32 16, %s19
      %p204 = scmp.lt.s32.totalorder %s203, 47
      %s205 = scalar_select %p204, %s203, 47
      %s206 = smul.addr %s205, 8
      %s207 = scalar_lea.vmem %s0, %s206
      %p208 = pneg %p48
      %p209 = pneg %p45
      %s210 = smul.u32 48, %s20
      %p211 = scmp.lt.s32.totalorder %s210, 47
      %s212 = scalar_select %p211, %s210, 47
      %s213 = smul.addr %s212, 8
      %s214 = scalar_lea.vmem %s1, %s213
      %p215 = pneg %p74
      %p216 = pneg %p71
      %s217 = smul.u32 16, %s19
      %p218 = scmp.lt.s32.totalorder %s217, 47
      %s219 = scalar_select %p218, %s217, 47
      %s220 = smul.addr %s219, 8
      %s221 = scalar_lea.vmem %s2, %s220
      %p222 = pneg %p100
      %p223 = pneg %p97
      %p224 = pneg %p121
      %p225 = pneg %p118
      %p226 = pneg %p147
      %p227 = pneg %p144
      %s228 = smul.u32 16, %s19
      %p229 = scmp.lt.s32.totalorder %s228, 47
      %s230 = scalar_select %p229, %s228, 47
      %s231 = smul.addr %s230, 8
      %s232 = scalar_lea.vmem %s4, %s231
      %s233 = smul.u32 16, %s19
      %p234 = scmp.lt.s32.totalorder %s233, 47
      %s235 = scalar_select %p234, %s233, 47
      %s236 = smul.addr %s235, 8
      %s237 = scalar_lea.vmem %s0, %s236
      %s238 = smul.u32 16, %s19
      %s239 = smul.u32 48, %s20
      %p240 = scmp.lt.s32.totalorder %s239, 47
      %s241 = scalar_select %p240, %s239, 47
      %s242 = smul.addr %s241, 8
      %s243 = scalar_lea.vmem %s1, %s242
      %s244 = smul.u32 48, %s20
      %s245 = smul.u32 16, %s19
      %p246 = scmp.lt.s32.totalorder %s245, 47
      %s247 = scalar_select %p246, %s245, 47
      %s248 = smul.addr %s247, 8
      %s249 = scalar_lea.vmem %s2, %s248
      %s250 = smul.u32 16, %s19
      %s251 = smul.u32 16, %s19
      %p252 = scmp.lt.s32.totalorder %s251, 47
      %s253 = scalar_select %p252, %s251, 47
      %s254 = smul.addr %s253, 8
      %s255 = scalar_lea.vmem %s4, %s254
      %s256 = smul.u32 16, %s19
      %v257 = vld [vmem:[%s237] sm:$0xff]
      %v258 = vld [vmem:[%s237 + $0x8] sm:$0xff]
      %v259 = vld [vmem:[%s237 + $0x10] sm:$0xff]
      %v260 = vld [vmem:[%s237 + $0x18] sm:$0xff]
      %v261 = vld [vmem:[%s237 + $0x20] sm:$0xff]
      %v262 = vld [vmem:[%s237 + $0x28] sm:$0xff]
      %v263 = vld [vmem:[%s237 + $0x30] sm:$0xff]
      %v264 = vld [vmem:[%s237 + $0x38] sm:$0xff]
      %v265 = vld [vmem:[%s237 + $0x40] sm:$0xff]
      %v266 = vld [vmem:[%s237 + $0x48] sm:$0xff]
      %v267 = vld [vmem:[%s237 + $0x50] sm:$0xff]
      %v268 = vld [vmem:[%s237 + $0x58] sm:$0xff]
      %v269 = vld [vmem:[%s237 + $0x60] sm:$0xff]
      %v270 = vld [vmem:[%s237 + $0x68] sm:$0xff]
      %v271 = vld [vmem:[%s237 + $0x70] sm:$0xff]
      %v272 = vld [vmem:[%s237 + $0x78] sm:$0xff]
      %v273 = vld [vmem:[%s243] sm:$0xff]
      %v274 = vld [vmem:[%s243 + $0x8] sm:$0xff]
      %v275 = vld [vmem:[%s243 + $0x10] sm:$0xff]
      %v276 = vld [vmem:[%s243 + $0x18] sm:$0xff]
      %v277 = vld [vmem:[%s243 + $0x20] sm:$0xff]
      %v278 = vld [vmem:[%s243 + $0x28] sm:$0xff]
      %v279 = vld [vmem:[%s243 + $0x30] sm:$0xff]
      %v280 = vld [vmem:[%s243 + $0x38] sm:$0xff]
      %v281 = vld [vmem:[%s243 + $0x40] sm:$0xff]
      %v282 = vld [vmem:[%s243 + $0x48] sm:$0xff]
      %v283 = vld [vmem:[%s243 + $0x50] sm:$0xff]
      %v284 = vld [vmem:[%s243 + $0x58] sm:$0xff]
      %v285 = vld [vmem:[%s243 + $0x60] sm:$0xff]
      %v286 = vld [vmem:[%s243 + $0x68] sm:$0xff]
      %v287 = vld [vmem:[%s243 + $0x70] sm:$0xff]
      %v288 = vld [vmem:[%s243 + $0x78] sm:$0xff]
      %v289 = vld [vmem:[%s243 + $0x80] sm:$0xff]
      %v290 = vld [vmem:[%s243 + $0x88] sm:$0xff]
      %v291 = vld [vmem:[%s243 + $0x90] sm:$0xff]
      %v292 = vld [vmem:[%s243 + $0x98] sm:$0xff]
      %v293 = vld [vmem:[%s243 + $0xa0] sm:$0xff]
      %v294 = vld [vmem:[%s243 + $0xa8] sm:$0xff]
      %v295 = vld [vmem:[%s243 + $0xb0] sm:$0xff]
      %v296 = vld [vmem:[%s243 + $0xb8] sm:$0xff]
      %v297 = vld [vmem:[%s243 + $0xc0] sm:$0xff]
      %v298 = vld [vmem:[%s243 + $0xc8] sm:$0xff]
      %v299 = vld [vmem:[%s243 + $0xd0] sm:$0xff]
      %v300 = vld [vmem:[%s243 + $0xd8] sm:$0xff]
      %v301 = vld [vmem:[%s243 + $0xe0] sm:$0xff]
      %v302 = vld [vmem:[%s243 + $0xe8] sm:$0xff]
      %v303 = vld [vmem:[%s243 + $0xf0] sm:$0xff]
      %v304 = vld [vmem:[%s243 + $0xf8] sm:$0xff]
      %v305 = vld [vmem:[%s243 + $0x100] sm:$0xff]
      %v306 = vld [vmem:[%s243 + $0x108] sm:$0xff]
      %v307 = vld [vmem:[%s243 + $0x110] sm:$0xff]
      %v308 = vld [vmem:[%s243 + $0x118] sm:$0xff]
      %v309 = vld [vmem:[%s243 + $0x120] sm:$0xff]
      %v310 = vld [vmem:[%s243 + $0x128] sm:$0xff]
      %v311 = vld [vmem:[%s243 + $0x130] sm:$0xff]
      %v312 = vld [vmem:[%s243 + $0x138] sm:$0xff]
      %v313 = vld [vmem:[%s243 + $0x140] sm:$0xff]
      %v314 = vld [vmem:[%s243 + $0x148] sm:$0xff]
      %v315 = vld [vmem:[%s243 + $0x150] sm:$0xff]
      %v316 = vld [vmem:[%s243 + $0x158] sm:$0xff]
      %v317 = vld [vmem:[%s243 + $0x160] sm:$0xff]
      %v318 = vld [vmem:[%s243 + $0x168] sm:$0xff]
      %v319 = vld [vmem:[%s243 + $0x170] sm:$0xff]
      %v320 = vld [vmem:[%s243 + $0x178] sm:$0xff]
      %vm321 = vcmask 523264
      %v323 = vsel %vm321, %v257, 0
      %v326 = vsel %vm321, %v258, 0
      %v329 = vsel %vm321, %v259, 0
      %v332 = vsel %vm321, %v260, 0
      %v335 = vsel %vm321, %v261, 0
      %v338 = vsel %vm321, %v262, 0
      %v341 = vsel %vm321, %v263, 0
      %v344 = vsel %vm321, %v264, 0
      %v347 = vsel %vm321, %v265, 0
      %v350 = vsel %vm321, %v266, 0
      %v353 = vsel %vm321, %v267, 0
      %v356 = vsel %vm321, %v268, 0
      %v359 = vsel %vm321, %v269, 0
      %v362 = vsel %vm321, %v270, 0
      %v365 = vsel %vm321, %v271, 0
      %v368 = vsel %vm321, %v272, 0
      %v371 = vsel %vm321, %v273, 0
      %v374 = vsel %vm321, %v274, 0
      %v377 = vsel %vm321, %v275, 0
      %v380 = vsel %vm321, %v276, 0
      %v383 = vsel %vm321, %v277, 0
      %v386 = vsel %vm321, %v278, 0
      %v389 = vsel %vm321, %v279, 0
      %v392 = vsel %vm321, %v280, 0
      %v395 = vsel %vm321, %v281, 0
      %v398 = vsel %vm321, %v282, 0
      %v401 = vsel %vm321, %v283, 0
      %v404 = vsel %vm321, %v284, 0
      %v407 = vsel %vm321, %v285, 0
      %v410 = vsel %vm321, %v286, 0
      %v413 = vsel %vm321, %v287, 0
      %v416 = vsel %vm321, %v288, 0
      %v419 = vsel %vm321, %v289, 0
      %v422 = vsel %vm321, %v290, 0
      %v425 = vsel %vm321, %v291, 0
      %v428 = vsel %vm321, %v292, 0
      %v431 = vsel %vm321, %v293, 0
      %v434 = vsel %vm321, %v294, 0
      %v437 = vsel %vm321, %v295, 0
      %v440 = vsel %vm321, %v296, 0
      %v443 = vsel %vm321, %v297, 0
      %v446 = vsel %vm321, %v298, 0
      %v449 = vsel %vm321, %v299, 0
      %v452 = vsel %vm321, %v300, 0
      %v455 = vsel %vm321, %v301, 0
      %v458 = vsel %vm321, %v302, 0
      %v461 = vsel %vm321, %v303, 0
      %v464 = vsel %vm321, %v304, 0
      %v467 = vsel %vm321, %v305, 0
      %v470 = vsel %vm321, %v306, 0
      %v473 = vsel %vm321, %v307, 0
      %v476 = vsel %vm321, %v308, 0
      %v479 = vsel %vm321, %v309, 0
      %v482 = vsel %vm321, %v310, 0
      %v485 = vsel %vm321, %v311, 0
      %v488 = vsel %vm321, %v312, 0
      %v491 = vsel %vm321, %v313, 0
      %v494 = vsel %vm321, %v314, 0
      %v497 = vsel %vm321, %v315, 0
      %v500 = vsel %vm321, %v316, 0
      %v503 = vsel %vm321, %v317, 0
      %v506 = vsel %vm321, %v318, 0
      %v509 = vsel %vm321, %v319, 0
      %v512 = vsel %vm321, %v320, 0
      %514 = vmatprep.subr.mxu0 0.0
      %515 = vmatpush1.xpose.msra.mxu0 %v416
      %516 = vmatprep.subr.mxu0 0.0
      %517 = vmatpush1.xpose.msra.mxu0 %v413
      %518 = vmatprep.subr.mxu0 0.0
      %519 = vmatpush1.xpose.msra.mxu0 %v410
      %520 = vmatprep.subr.mxu0 0.0
      %521 = vmatpush1.xpose.msra.mxu0 %v407
      %522 = vmatprep.subr.mxu0 0.0
      %523 = vmatpush1.xpose.msra.mxu0 %v404
      %524 = vmatprep.subr.mxu0 0.0
      %525 = vmatpush1.xpose.msra.mxu0 %v401
      %526 = vmatprep.subr.mxu0 0.0
      %527 = vmatpush1.xpose.msra.mxu0 %v398
      %528 = vmatprep.subr.mxu0 0.0
      %529 = vmatpush1.xpose.msra.mxu0 %v395
      %530 = vmatprep.subr.mxu0 0.0
      %531 = vmatpush1.xpose.msra.mxu0 %v392
      %532 = vmatprep.subr.mxu0 0.0
      %533 = vmatpush1.xpose.msra.mxu0 %v389
      %534 = vmatprep.subr.mxu0 0.0
      %535 = vmatpush1.xpose.msra.mxu0 %v386
      %536 = vmatprep.subr.mxu0 0.0
      %537 = vmatpush1.xpose.msra.mxu0 %v383
      %538 = vmatprep.subr.mxu0 0.0
      %539 = vmatpush1.xpose.msra.mxu0 %v380
      %540 = vmatprep.subr.mxu0 0.0
      %541 = vmatpush1.xpose.msra.mxu0 %v377
      %542 = vmatprep.subr.mxu0 0.0
      %543 = vmatpush1.xpose.msra.mxu0 %v374
      %544 = vmatprep.subr.mxu0 0.0
      %545 = vmatpush1.xpose.msra.mxu0 %v371
      %546 = vmatprep.subr.mxu0 0.0
      %547 = vmatpush2.xpose.msra.mxu0 %v464
      %548 = vmatprep.subr.mxu0 0.0
      %549 = vmatpush2.xpose.msra.mxu0 %v461
      %550 = vmatprep.subr.mxu0 0.0
      %551 = vmatpush2.xpose.msra.mxu0 %v458
      %552 = vmatprep.subr.mxu0 0.0
      %553 = vmatpush2.xpose.msra.mxu0 %v455
      %554 = vmatprep.subr.mxu0 0.0
      %555 = vmatpush2.xpose.msra.mxu0 %v452
      %556 = vmatprep.subr.mxu0 0.0
      %557 = vmatpush2.xpose.msra.mxu0 %v449
      %558 = vmatprep.subr.mxu0 0.0
      %559 = vmatpush2.xpose.msra.mxu0 %v446
      %560 = vmatprep.subr.mxu0 0.0
      %561 = vmatpush2.xpose.msra.mxu0 %v443
      %562 = vmatprep.subr.mxu0 0.0
      %563 = vmatpush2.xpose.msra.mxu0 %v440
      %564 = vmatprep.subr.mxu0 0.0
      %565 = vmatpush2.xpose.msra.mxu0 %v437
      %566 = vmatprep.subr.mxu0 0.0
      %567 = vmatpush2.xpose.msra.mxu0 %v434
      %568 = vmatprep.subr.mxu0 0.0
      %569 = vmatpush2.xpose.msra.mxu0 %v431
      %570 = vmatprep.subr.mxu0 0.0
      %571 = vmatpush2.xpose.msra.mxu0 %v428
      %572 = vmatprep.subr.mxu0 0.0
      %573 = vmatpush2.xpose.msra.mxu0 %v425
      %574 = vmatprep.subr.mxu0 0.0
      %575 = vmatpush2.xpose.msra.mxu0 %v422
      %576 = vmatprep.subr.mxu0 0.0
      %577 = vmatpush2.xpose.msra.mxu0 %v419
      %578 = vmatprep.mubr.f32.mxu0 0.0
      %579 = vmatmul.mubr.f32.gmra.mxu0 %v323
      %v580 = vpop.f32.mrf.mxu0
      %v581 = vadd.f32 0.0, %v580
      %v582 = vpop.f32.mrf.mxu0
      %v583 = vadd.f32 0.0, %v582
      %584 = vmatprep.mubr.f32.mxu0 0.0
      %585 = vmatmul.mubr.f32.gmra.mxu0 %v326
      %v586 = vpop.f32.mrf.mxu0
      %v587 = vadd.f32 0.0, %v586
      %v588 = vpop.f32.mrf.mxu0
      %v589 = vadd.f32 0.0, %v588
      %590 = vmatprep.mubr.f32.mxu0 0.0
      %591 = vmatmul.mubr.f32.gmra.mxu0 %v329
      %v592 = vpop.f32.mrf.mxu0
      %v593 = vadd.f32 0.0, %v592
      %v594 = vpop.f32.mrf.mxu0
      %v595 = vadd.f32 0.0, %v594
      %596 = vmatprep.mubr.f32.mxu0 0.0
      %597 = vmatmul.mubr.f32.gmra.mxu0 %v332
      %v598 = vpop.f32.mrf.mxu0
      %v599 = vadd.f32 0.0, %v598
      %v600 = vpop.f32.mrf.mxu0
      %v601 = vadd.f32 0.0, %v600
      %602 = vmatprep.mubr.f32.mxu0 0.0
      %603 = vmatmul.mubr.f32.gmra.mxu0 %v335
      %v604 = vpop.f32.mrf.mxu0
      %v605 = vadd.f32 0.0, %v604
      %v606 = vpop.f32.mrf.mxu0
      %v607 = vadd.f32 0.0, %v606
      %608 = vmatprep.mubr.f32.mxu0 0.0
      %609 = vmatmul.mubr.f32.gmra.mxu0 %v338
      %v610 = vpop.f32.mrf.mxu0
      %v611 = vadd.f32 0.0, %v610
      %v612 = vpop.f32.mrf.mxu0
      %v613 = vadd.f32 0.0, %v612
      %614 = vmatprep.mubr.f32.mxu0 0.0
      %615 = vmatmul.mubr.f32.gmra.mxu0 %v341
      %v616 = vpop.f32.mrf.mxu0
      %v617 = vadd.f32 0.0, %v616
      %v618 = vpop.f32.mrf.mxu0
      %v619 = vadd.f32 0.0, %v618
      %620 = vmatprep.mubr.f32.mxu0 0.0
      %621 = vmatmul.mubr.f32.gmra.mxu0 %v344
      %v622 = vpop.f32.mrf.mxu0
      %v623 = vadd.f32 0.0, %v622
      %v624 = vpop.f32.mrf.mxu0
      %v625 = vadd.f32 0.0, %v624
      %626 = vmatprep.mubr.f32.mxu0 0.0
      %627 = vmatmul.mubr.f32.gmra.mxu0 %v347
      %v628 = vpop.f32.mrf.mxu0
      %v629 = vadd.f32 0.0, %v628
      %v630 = vpop.f32.mrf.mxu0
      %v631 = vadd.f32 0.0, %v630
      %632 = vmatprep.mubr.f32.mxu0 0.0
      %633 = vmatmul.mubr.f32.gmra.mxu0 %v350
      %v634 = vpop.f32.mrf.mxu0
      %v635 = vadd.f32 0.0, %v634
      %v636 = vpop.f32.mrf.mxu0
      %v637 = vadd.f32 0.0, %v636
      %638 = vmatprep.mubr.f32.mxu0 0.0
      %639 = vmatmul.mubr.f32.gmra.mxu0 %v353
      %v640 = vpop.f32.mrf.mxu0
      %v641 = vadd.f32 0.0, %v640
      %v642 = vpop.f32.mrf.mxu0
      %v643 = vadd.f32 0.0, %v642
      %644 = vmatprep.mubr.f32.mxu0 0.0
      %645 = vmatmul.mubr.f32.gmra.mxu0 %v356
      %v646 = vpop.f32.mrf.mxu0
      %v647 = vadd.f32 0.0, %v646
      %v648 = vpop.f32.mrf.mxu0
      %v649 = vadd.f32 0.0, %v648
      %650 = vmatprep.mubr.f32.mxu0 0.0
      %651 = vmatmul.mubr.f32.gmra.mxu0 %v359
      %v652 = vpop.f32.mrf.mxu0
      %v653 = vadd.f32 0.0, %v652
      %v654 = vpop.f32.mrf.mxu0
      %v655 = vadd.f32 0.0, %v654
      %656 = vmatprep.mubr.f32.mxu0 0.0
      %657 = vmatmul.mubr.f32.gmra.mxu0 %v362
      %v658 = vpop.f32.mrf.mxu0
      %v659 = vadd.f32 0.0, %v658
      %v660 = vpop.f32.mrf.mxu0
      %v661 = vadd.f32 0.0, %v660
      %662 = vmatprep.mubr.f32.mxu0 0.0
      %663 = vmatmul.mubr.f32.gmra.mxu0 %v365
      %v664 = vpop.f32.mrf.mxu0
      %v665 = vadd.f32 0.0, %v664
      %v666 = vpop.f32.mrf.mxu0
      %v667 = vadd.f32 0.0, %v666
      %668 = vmatprep.mubr.f32.mxu0 0.0
      %669 = vmatmul.mubr.f32.gmra.mxu0 %v368
      %v670 = vpop.f32.mrf.mxu0
      %v671 = vadd.f32 0.0, %v670
      %v672 = vpop.f32.mrf.mxu0
      %v673 = vadd.f32 0.0, %v672
      %674 = vdwg.mxu0
      %675 = vmatprep.subr.mxu0 0.0
      %676 = vmatpush1.xpose.msra.mxu0 %v512
      %677 = vmatprep.subr.mxu0 0.0
      %678 = vmatpush1.xpose.msra.mxu0 %v509
      %679 = vmatprep.subr.mxu0 0.0
      %680 = vmatpush1.xpose.msra.mxu0 %v506
      %681 = vmatprep.subr.mxu0 0.0
      %682 = vmatpush1.xpose.msra.mxu0 %v503
      %683 = vmatprep.subr.mxu0 0.0
      %684 = vmatpush1.xpose.msra.mxu0 %v500
      %685 = vmatprep.subr.mxu0 0.0
      %686 = vmatpush1.xpose.msra.mxu0 %v497
      %687 = vmatprep.subr.mxu0 0.0
      %688 = vmatpush1.xpose.msra.mxu0 %v494
      %689 = vmatprep.subr.mxu0 0.0
      %690 = vmatpush1.xpose.msra.mxu0 %v491
      %691 = vmatprep.subr.mxu0 0.0
      %692 = vmatpush1.xpose.msra.mxu0 %v488
      %693 = vmatprep.subr.mxu0 0.0
      %694 = vmatpush1.xpose.msra.mxu0 %v485
      %695 = vmatprep.subr.mxu0 0.0
      %696 = vmatpush1.xpose.msra.mxu0 %v482
      %697 = vmatprep.subr.mxu0 0.0
      %698 = vmatpush1.xpose.msra.mxu0 %v479
      %699 = vmatprep.subr.mxu0 0.0
      %700 = vmatpush1.xpose.msra.mxu0 %v476
      %701 = vmatprep.subr.mxu0 0.0
      %702 = vmatpush1.xpose.msra.mxu0 %v473
      %703 = vmatprep.subr.mxu0 0.0
      %704 = vmatpush1.xpose.msra.mxu0 %v470
      %705 = vmatprep.subr.mxu0 0.0
      %706 = vmatpush1.xpose.msra.mxu0 %v467
      %707 = vmatprep.subr.mxu0 0.0
      %708 = vmatpush2.xpose.msra.mxu0 0.0
      %709 = vmatprep.subr.mxu0 0.0
      %710 = vmatpush2.xpose.msra.mxu0 0.0
      %711 = vmatprep.subr.mxu0 0.0
      %712 = vmatpush2.xpose.msra.mxu0 0.0
      %713 = vmatprep.subr.mxu0 0.0
      %714 = vmatpush2.xpose.msra.mxu0 0.0
      %715 = vmatprep.subr.mxu0 0.0
      %716 = vmatpush2.xpose.msra.mxu0 0.0
      %717 = vmatprep.subr.mxu0 0.0
      %718 = vmatpush2.xpose.msra.mxu0 0.0
      %719 = vmatprep.subr.mxu0 0.0
      %720 = vmatpush2.xpose.msra.mxu0 0.0
      %721 = vmatprep.subr.mxu0 0.0
      %722 = vmatpush2.xpose.msra.mxu0 0.0
      %723 = vmatprep.subr.mxu0 0.0
      %724 = vmatpush2.xpose.msra.mxu0 0.0
      %725 = vmatprep.subr.mxu0 0.0
      %726 = vmatpush2.xpose.msra.mxu0 0.0
      %727 = vmatprep.subr.mxu0 0.0
      %728 = vmatpush2.xpose.msra.mxu0 0.0
      %729 = vmatprep.subr.mxu0 0.0
      %730 = vmatpush2.xpose.msra.mxu0 0.0
      %731 = vmatprep.subr.mxu0 0.0
      %732 = vmatpush2.xpose.msra.mxu0 0.0
      %733 = vmatprep.subr.mxu0 0.0
      %734 = vmatpush2.xpose.msra.mxu0 0.0
      %735 = vmatprep.subr.mxu0 0.0
      %736 = vmatpush2.xpose.msra.mxu0 0.0
      %737 = vmatprep.subr.mxu0 0.0
      %738 = vmatpush2.xpose.msra.mxu0 0.0
      %739 = vmatprep.mubr.f32.mxu0 0.0
      %740 = vmatmul.mubr.f32.gmra.mxu0 %v323
      %v741 = vpop.f32.mrf.mxu0
      %v742 = vadd.f32 0.0, %v741
      %v743 = vpop.f32.mrf.mxu0
      %744 = vmatprep.mubr.f32.mxu0 0.0
      %745 = vmatmul.mubr.f32.gmra.mxu0 %v326
      %v746 = vpop.f32.mrf.mxu0
      %v747 = vadd.f32 0.0, %v746
      %v748 = vpop.f32.mrf.mxu0
      %749 = vmatprep.mubr.f32.mxu0 0.0
      %750 = vmatmul.mubr.f32.gmra.mxu0 %v329
      %v751 = vpop.f32.mrf.mxu0
      %v752 = vadd.f32 0.0, %v751
      %v753 = vpop.f32.mrf.mxu0
      %754 = vmatprep.mubr.f32.mxu0 0.0
      %755 = vmatmul.mubr.f32.gmra.mxu0 %v332
      %v756 = vpop.f32.mrf.mxu0
      %v757 = vadd.f32 0.0, %v756
      %v758 = vpop.f32.mrf.mxu0
      %759 = vmatprep.mubr.f32.mxu0 0.0
      %760 = vmatmul.mubr.f32.gmra.mxu0 %v335
      %v761 = vpop.f32.mrf.mxu0
      %v762 = vadd.f32 0.0, %v761
      %v763 = vpop.f32.mrf.mxu0
      %764 = vmatprep.mubr.f32.mxu0 0.0
      %765 = vmatmul.mubr.f32.gmra.mxu0 %v338
      %v766 = vpop.f32.mrf.mxu0
      %v767 = vadd.f32 0.0, %v766
      %v768 = vpop.f32.mrf.mxu0
      %769 = vmatprep.mubr.f32.mxu0 0.0
      %770 = vmatmul.mubr.f32.gmra.mxu0 %v341
      %v771 = vpop.f32.mrf.mxu0
      %v772 = vadd.f32 0.0, %v771
      %v773 = vpop.f32.mrf.mxu0
      %774 = vmatprep.mubr.f32.mxu0 0.0
      %775 = vmatmul.mubr.f32.gmra.mxu0 %v344
      %v776 = vpop.f32.mrf.mxu0
      %v777 = vadd.f32 0.0, %v776
      %v778 = vpop.f32.mrf.mxu0
      %779 = vmatprep.mubr.f32.mxu0 0.0
      %780 = vmatmul.mubr.f32.gmra.mxu0 %v347
      %v781 = vpop.f32.mrf.mxu0
      %v782 = vadd.f32 0.0, %v781
      %v783 = vpop.f32.mrf.mxu0
      %784 = vmatprep.mubr.f32.mxu0 0.0
      %785 = vmatmul.mubr.f32.gmra.mxu0 %v350
      %v786 = vpop.f32.mrf.mxu0
      %v787 = vadd.f32 0.0, %v786
      %v788 = vpop.f32.mrf.mxu0
      %789 = vmatprep.mubr.f32.mxu0 0.0
      %790 = vmatmul.mubr.f32.gmra.mxu0 %v353
      %v791 = vpop.f32.mrf.mxu0
      %v792 = vadd.f32 0.0, %v791
      %v793 = vpop.f32.mrf.mxu0
      %794 = vmatprep.mubr.f32.mxu0 0.0
      %795 = vmatmul.mubr.f32.gmra.mxu0 %v356
      %v796 = vpop.f32.mrf.mxu0
      %v797 = vadd.f32 0.0, %v796
      %v798 = vpop.f32.mrf.mxu0
      %799 = vmatprep.mubr.f32.mxu0 0.0
      %800 = vmatmul.mubr.f32.gmra.mxu0 %v359
      %v801 = vpop.f32.mrf.mxu0
      %v802 = vadd.f32 0.0, %v801
      %v803 = vpop.f32.mrf.mxu0
      %804 = vmatprep.mubr.f32.mxu0 0.0
      %805 = vmatmul.mubr.f32.gmra.mxu0 %v362
      %v806 = vpop.f32.mrf.mxu0
      %v807 = vadd.f32 0.0, %v806
      %v808 = vpop.f32.mrf.mxu0
      %809 = vmatprep.mubr.f32.mxu0 0.0
      %810 = vmatmul.mubr.f32.gmra.mxu0 %v365
      %v811 = vpop.f32.mrf.mxu0
      %v812 = vadd.f32 0.0, %v811
      %v813 = vpop.f32.mrf.mxu0
      %814 = vmatprep.mubr.f32.mxu0 0.0
      %815 = vmatmul.mubr.f32.gmra.mxu0 %v368
      %v816 = vpop.f32.mrf.mxu0
      %v817 = vadd.f32 0.0, %v816
      %v818 = vpop.f32.mrf.mxu0
      %819 = vdwg.mxu0
      %v820 = vld [vmem:[%s3] sm:$0x7]
      %v821 = vld [vmem:[%s249] sm:$0xff]
      %v822 = vld [vmem:[%s249 + $0x8] sm:$0xff]
      %v823 = vld [vmem:[%s249 + $0x10] sm:$0xff]
      %v824 = vld [vmem:[%s249 + $0x18] sm:$0xff]
      %v825 = vld [vmem:[%s249 + $0x20] sm:$0xff]
      %v826 = vld [vmem:[%s249 + $0x28] sm:$0xff]
      %v827 = vld [vmem:[%s249 + $0x30] sm:$0xff]
      %v828 = vld [vmem:[%s249 + $0x38] sm:$0xff]
      %v829 = vld [vmem:[%s249 + $0x40] sm:$0xff]
      %v830 = vld [vmem:[%s249 + $0x48] sm:$0xff]
      %v831 = vld [vmem:[%s249 + $0x50] sm:$0xff]
      %v832 = vld [vmem:[%s249 + $0x58] sm:$0xff]
      %v833 = vld [vmem:[%s249 + $0x60] sm:$0xff]
      %v834 = vld [vmem:[%s249 + $0x68] sm:$0xff]
      %v835 = vld [vmem:[%s249 + $0x70] sm:$0xff]
      %v836 = vld [vmem:[%s249 + $0x78] sm:$0xff]
      %838 = vset.pattern.permute.xlu0 0
      %839 = vperm.xlu0 %838, %v821
      %v840 = vpop.permute.xlu0 %839
      %843 = vset.pattern.permute.xlu0 0
      %844 = vperm.xlu0 %843, %v822
      %v845 = vpop.permute.xlu0 %844
      %848 = vset.pattern.permute.xlu0 0
      %849 = vperm.xlu0 %848, %v823
      %v850 = vpop.permute.xlu0 %849
      %853 = vset.pattern.permute.xlu0 0
      %854 = vperm.xlu0 %853, %v824
      %v855 = vpop.permute.xlu0 %854
      %858 = vset.pattern.permute.xlu0 0
      %859 = vperm.xlu0 %858, %v825
      %v860 = vpop.permute.xlu0 %859
      %863 = vset.pattern.permute.xlu0 0
      %864 = vperm.xlu0 %863, %v826
      %v865 = vpop.permute.xlu0 %864
      %868 = vset.pattern.permute.xlu0 0
      %869 = vperm.xlu0 %868, %v827
      %v870 = vpop.permute.xlu0 %869
      %873 = vset.pattern.permute.xlu0 0
      %874 = vperm.xlu0 %873, %v828
      %v875 = vpop.permute.xlu0 %874
      %878 = vset.pattern.permute.xlu0 0
      %879 = vperm.xlu0 %878, %v829
      %v880 = vpop.permute.xlu0 %879
      %883 = vset.pattern.permute.xlu0 0
      %884 = vperm.xlu0 %883, %v830
      %v885 = vpop.permute.xlu0 %884
      %888 = vset.pattern.permute.xlu0 0
      %889 = vperm.xlu0 %888, %v831
      %v890 = vpop.permute.xlu0 %889
      %893 = vset.pattern.permute.xlu0 0
      %894 = vperm.xlu0 %893, %v832
      %v895 = vpop.permute.xlu0 %894
      %898 = vset.pattern.permute.xlu0 0
      %899 = vperm.xlu0 %898, %v833
      %v900 = vpop.permute.xlu0 %899
      %903 = vset.pattern.permute.xlu0 0
      %904 = vperm.xlu0 %903, %v834
      %v905 = vpop.permute.xlu0 %904
      %908 = vset.pattern.permute.xlu0 0
      %909 = vperm.xlu0 %908, %v835
      %v910 = vpop.permute.xlu0 %909
      %913 = vset.pattern.permute.xlu0 0
      %914 = vperm.xlu0 %913, %v836
      %v915 = vpop.permute.xlu0 %914
      %v917 = vsub.f32 %v581, %v840
      %v918 = vsub.f32 %v583, %v840
      %v919 = vsub.f32 %v742, %v840
      %v920 = vsub.f32 %v587, %v845
      %v921 = vsub.f32 %v589, %v845
      %v922 = vsub.f32 %v747, %v845
      %v923 = vsub.f32 %v593, %v850
      %v924 = vsub.f32 %v595, %v850
      %v925 = vsub.f32 %v752, %v850
      %v926 = vsub.f32 %v599, %v855
      %v927 = vsub.f32 %v601, %v855
      %v928 = vsub.f32 %v757, %v855
      %v929 = vsub.f32 %v605, %v860
      %v930 = vsub.f32 %v607, %v860
      %v931 = vsub.f32 %v762, %v860
      %v932 = vsub.f32 %v611, %v865
      %v933 = vsub.f32 %v613, %v865
      %v934 = vsub.f32 %v767, %v865
      %v935 = vsub.f32 %v617, %v870
      %v936 = vsub.f32 %v619, %v870
      %v937 = vsub.f32 %v772, %v870
      %v938 = vsub.f32 %v623, %v875
      %v939 = vsub.f32 %v625, %v875
      %v940 = vsub.f32 %v777, %v875
      %v941 = vsub.f32 %v629, %v880
      %v942 = vsub.f32 %v631, %v880
      %v943 = vsub.f32 %v782, %v880
      %v944 = vsub.f32 %v635, %v885
      %v945 = vsub.f32 %v637, %v885
      %v946 = vsub.f32 %v787, %v885
      %v947 = vsub.f32 %v641, %v890
      %v948 = vsub.f32 %v643, %v890
      %v949 = vsub.f32 %v792, %v890
      %v950 = vsub.f32 %v647, %v895
      %v951 = vsub.f32 %v649, %v895
      %v952 = vsub.f32 %v797, %v895
      %v953 = vsub.f32 %v653, %v900
      %v954 = vsub.f32 %v655, %v900
      %v955 = vsub.f32 %v802, %v900
      %v956 = vsub.f32 %v659, %v905
      %v957 = vsub.f32 %v661, %v905
      %v958 = vsub.f32 %v807, %v905
      %v959 = vsub.f32 %v665, %v910
      %v960 = vsub.f32 %v667, %v910
      %v961 = vsub.f32 %v812, %v910
      %v962 = vsub.f32 %v671, %v915
      %v963 = vsub.f32 %v673, %v915
      %v964 = vsub.f32 %v817, %v915
      %v965 = vmax.f32 %v917, 0.0
      %v966 = vmax.f32 %v918, 0.0
      %v967 = vmax.f32 %v919, 0.0
      %v968 = vmax.f32 %v920, 0.0
      %v969 = vmax.f32 %v921, 0.0
      %v970 = vmax.f32 %v922, 0.0
      %v971 = vmax.f32 %v923, 0.0
      %v972 = vmax.f32 %v924, 0.0
      %v973 = vmax.f32 %v925, 0.0
      %v974 = vmax.f32 %v926, 0.0
      %v975 = vmax.f32 %v927, 0.0
      %v976 = vmax.f32 %v928, 0.0
      %v977 = vmax.f32 %v929, 0.0
      %v978 = vmax.f32 %v930, 0.0
      %v979 = vmax.f32 %v931, 0.0
      %v980 = vmax.f32 %v932, 0.0
      %v981 = vmax.f32 %v933, 0.0
      %v982 = vmax.f32 %v934, 0.0
      %v983 = vmax.f32 %v935, 0.0
      %v984 = vmax.f32 %v936, 0.0
      %v985 = vmax.f32 %v937, 0.0
      %v986 = vmax.f32 %v938, 0.0
      %v987 = vmax.f32 %v939, 0.0
      %v988 = vmax.f32 %v940, 0.0
      %v989 = vmax.f32 %v941, 0.0
      %v990 = vmax.f32 %v942, 0.0
      %v991 = vmax.f32 %v943, 0.0
      %v992 = vmax.f32 %v944, 0.0
      %v993 = vmax.f32 %v945, 0.0
      %v994 = vmax.f32 %v946, 0.0
      %v995 = vmax.f32 %v947, 0.0
      %v996 = vmax.f32 %v948, 0.0
      %v997 = vmax.f32 %v949, 0.0
      %v998 = vmax.f32 %v950, 0.0
      %v999 = vmax.f32 %v951, 0.0
      %v1000 = vmax.f32 %v952, 0.0
      %v1001 = vmax.f32 %v953, 0.0
      %v1002 = vmax.f32 %v954, 0.0
      %v1003 = vmax.f32 %v955, 0.0
      %v1004 = vmax.f32 %v956, 0.0
      %v1005 = vmax.f32 %v957, 0.0
      %v1006 = vmax.f32 %v958, 0.0
      %v1007 = vmax.f32 %v959, 0.0
      %v1008 = vmax.f32 %v960, 0.0
      %v1009 = vmax.f32 %v961, 0.0
      %v1010 = vmax.f32 %v962, 0.0
      %v1011 = vmax.f32 %v963, 0.0
      %v1012 = vmax.f32 %v964, 0.0
      %v1014 = vlaneseq
      %v1015 = vshrl.u32 %v1014, 7
      %v1016 = vsub.s32 0, %v1015
      %v1017 = vrot.slane %v820, %v1016
      %v1018 = vlaneseq
      %v1019 = vshrl.u32 %v1018, 7
      %v1020 = vsub.s32 1, %v1019
      %v1021 = vrot.slane %v820, %v1020
      %v1022 = vlaneseq
      %v1023 = vshrl.u32 %v1022, 7
      %v1024 = vsub.s32 2, %v1023
      %v1025 = vrot.slane %v820, %v1024
      %v1029 = vsub.f32 %v581, %v1017
      %v1030 = vsub.f32 %v583, %v1021
      %v1031 = vsub.f32 %v742, %v1025
      %v1032 = vsub.f32 %v587, %v1017
      %v1033 = vsub.f32 %v589, %v1021
      %v1034 = vsub.f32 %v747, %v1025
      %v1035 = vsub.f32 %v593, %v1017
      %v1036 = vsub.f32 %v595, %v1021
      %v1037 = vsub.f32 %v752, %v1025
      %v1038 = vsub.f32 %v599, %v1017
      %v1039 = vsub.f32 %v601, %v1021
      %v1040 = vsub.f32 %v757, %v1025
      %v1041 = vsub.f32 %v605, %v1017
      %v1042 = vsub.f32 %v607, %v1021
      %v1043 = vsub.f32 %v762, %v1025
      %v1044 = vsub.f32 %v611, %v1017
      %v1045 = vsub.f32 %v613, %v1021
      %v1046 = vsub.f32 %v767, %v1025
      %v1047 = vsub.f32 %v617, %v1017
      %v1048 = vsub.f32 %v619, %v1021
      %v1049 = vsub.f32 %v772, %v1025
      %v1050 = vsub.f32 %v623, %v1017
      %v1051 = vsub.f32 %v625, %v1021
      %v1052 = vsub.f32 %v777, %v1025
      %v1053 = vsub.f32 %v629, %v1017
      %v1054 = vsub.f32 %v631, %v1021
      %v1055 = vsub.f32 %v782, %v1025
      %v1056 = vsub.f32 %v635, %v1017
      %v1057 = vsub.f32 %v637, %v1021
      %v1058 = vsub.f32 %v787, %v1025
      %v1059 = vsub.f32 %v641, %v1017
      %v1060 = vsub.f32 %v643, %v1021
      %v1061 = vsub.f32 %v792, %v1025
      %v1062 = vsub.f32 %v647, %v1017
      %v1063 = vsub.f32 %v649, %v1021
      %v1064 = vsub.f32 %v797, %v1025
      %v1065 = vsub.f32 %v653, %v1017
      %v1066 = vsub.f32 %v655, %v1021
      %v1067 = vsub.f32 %v802, %v1025
      %v1068 = vsub.f32 %v659, %v1017
      %v1069 = vsub.f32 %v661, %v1021
      %v1070 = vsub.f32 %v807, %v1025
      %v1071 = vsub.f32 %v665, %v1017
      %v1072 = vsub.f32 %v667, %v1021
      %v1073 = vsub.f32 %v812, %v1025
      %v1074 = vsub.f32 %v671, %v1017
      %v1075 = vsub.f32 %v673, %v1021
      %v1076 = vsub.f32 %v817, %v1025
      %v1077 = vmax.f32 %v1029, 0.0
      %v1078 = vmax.f32 %v1030, 0.0
      %v1079 = vmax.f32 %v1031, 0.0
      %v1080 = vmax.f32 %v1032, 0.0
      %v1081 = vmax.f32 %v1033, 0.0
      %v1082 = vmax.f32 %v1034, 0.0
      %v1083 = vmax.f32 %v1035, 0.0
      %v1084 = vmax.f32 %v1036, 0.0
      %v1085 = vmax.f32 %v1037, 0.0
      %v1086 = vmax.f32 %v1038, 0.0
      %v1087 = vmax.f32 %v1039, 0.0
      %v1088 = vmax.f32 %v1040, 0.0
      %v1089 = vmax.f32 %v1041, 0.0
      %v1090 = vmax.f32 %v1042, 0.0
      %v1091 = vmax.f32 %v1043, 0.0
      %v1092 = vmax.f32 %v1044, 0.0
      %v1093 = vmax.f32 %v1045, 0.0
      %v1094 = vmax.f32 %v1046, 0.0
      %v1095 = vmax.f32 %v1047, 0.0
      %v1096 = vmax.f32 %v1048, 0.0
      %v1097 = vmax.f32 %v1049, 0.0
      %v1098 = vmax.f32 %v1050, 0.0
      %v1099 = vmax.f32 %v1051, 0.0
      %v1100 = vmax.f32 %v1052, 0.0
      %v1101 = vmax.f32 %v1053, 0.0
      %v1102 = vmax.f32 %v1054, 0.0
      %v1103 = vmax.f32 %v1055, 0.0
      %v1104 = vmax.f32 %v1056, 0.0
      %v1105 = vmax.f32 %v1057, 0.0
      %v1106 = vmax.f32 %v1058, 0.0
      %v1107 = vmax.f32 %v1059, 0.0
      %v1108 = vmax.f32 %v1060, 0.0
      %v1109 = vmax.f32 %v1061, 0.0
      %v1110 = vmax.f32 %v1062, 0.0
      %v1111 = vmax.f32 %v1063, 0.0
      %v1112 = vmax.f32 %v1064, 0.0
      %v1113 = vmax.f32 %v1065, 0.0
      %v1114 = vmax.f32 %v1066, 0.0
      %v1115 = vmax.f32 %v1067, 0.0
      %v1116 = vmax.f32 %v1068, 0.0
      %v1117 = vmax.f32 %v1069, 0.0
      %v1118 = vmax.f32 %v1070, 0.0
      %v1119 = vmax.f32 %v1071, 0.0
      %v1120 = vmax.f32 %v1072, 0.0
      %v1121 = vmax.f32 %v1073, 0.0
      %v1122 = vmax.f32 %v1074, 0.0
      %v1123 = vmax.f32 %v1075, 0.0
      %v1124 = vmax.f32 %v1076, 0.0
      %v1125 = vadd.f32 %v965, %v1077
      %v1126 = vadd.f32 %v966, %v1078
      %v1127 = vadd.f32 %v967, %v1079
      %v1128 = vadd.f32 %v968, %v1080
      %v1129 = vadd.f32 %v969, %v1081
      %v1130 = vadd.f32 %v970, %v1082
      %v1131 = vadd.f32 %v971, %v1083
      %v1132 = vadd.f32 %v972, %v1084
      %v1133 = vadd.f32 %v973, %v1085
      %v1134 = vadd.f32 %v974, %v1086
      %v1135 = vadd.f32 %v975, %v1087
      %v1136 = vadd.f32 %v976, %v1088
      %v1137 = vadd.f32 %v977, %v1089
      %v1138 = vadd.f32 %v978, %v1090
      %v1139 = vadd.f32 %v979, %v1091
      %v1140 = vadd.f32 %v980, %v1092
      %v1141 = vadd.f32 %v981, %v1093
      %v1142 = vadd.f32 %v982, %v1094
      %v1143 = vadd.f32 %v983, %v1095
      %v1144 = vadd.f32 %v984, %v1096
      %v1145 = vadd.f32 %v985, %v1097
      %v1146 = vadd.f32 %v986, %v1098
      %v1147 = vadd.f32 %v987, %v1099
      %v1148 = vadd.f32 %v988, %v1100
      %v1149 = vadd.f32 %v989, %v1101
      %v1150 = vadd.f32 %v990, %v1102
      %v1151 = vadd.f32 %v991, %v1103
      %v1152 = vadd.f32 %v992, %v1104
      %v1153 = vadd.f32 %v993, %v1105
      %v1154 = vadd.f32 %v994, %v1106
      %v1155 = vadd.f32 %v995, %v1107
      %v1156 = vadd.f32 %v996, %v1108
      %v1157 = vadd.f32 %v997, %v1109
      %v1158 = vadd.f32 %v998, %v1110
      %v1159 = vadd.f32 %v999, %v1111
      %v1160 = vadd.f32 %v1000, %v1112
      %v1161 = vadd.f32 %v1001, %v1113
      %v1162 = vadd.f32 %v1002, %v1114
      %v1163 = vadd.f32 %v1003, %v1115
      %v1164 = vadd.f32 %v1004, %v1116
      %v1165 = vadd.f32 %v1005, %v1117
      %v1166 = vadd.f32 %v1006, %v1118
      %v1167 = vadd.f32 %v1007, %v1119
      %v1168 = vadd.f32 %v1008, %v1120
      %v1169 = vadd.f32 %v1009, %v1121
      %v1170 = vadd.f32 %v1010, %v1122
      %v1171 = vadd.f32 %v1011, %v1123
      %v1172 = vadd.f32 %v1012, %v1124
      %p1173 = scmp.eq.s32.totalorder %s20, 0
      // Predicated region
      $region37: #{tpu_custom_call.1} parent=35 // pred_check
        %p1174 = pneg %p1173
      $region38: #{tpu_custom_call.1} parent=35 // pred_check_branch
        %1176 = sbr.rel (%p1174) target = $region40
      $region39: #{tpu_custom_call.1} parent=35 // pred_region
        %vm1177 = vcmask 7168
        %1178 = vst.msk [vmem:[%s255] sm:$0xff] %vm1177, 0.0
        %1179 = vst.msk [vmem:[%s255 + $0x8] sm:$0xff] %vm1177, 0.0
        %1180 = vst.msk [vmem:[%s255 + $0x10] sm:$0xff] %vm1177, 0.0
        %1181 = vst.msk [vmem:[%s255 + $0x18] sm:$0xff] %vm1177, 0.0
        %1182 = vst.msk [vmem:[%s255 + $0x20] sm:$0xff] %vm1177, 0.0
        %1183 = vst.msk [vmem:[%s255 + $0x28] sm:$0xff] %vm1177, 0.0
        %1184 = vst.msk [vmem:[%s255 + $0x30] sm:$0xff] %vm1177, 0.0
        %1185 = vst.msk [vmem:[%s255 + $0x38] sm:$0xff] %vm1177, 0.0
        %1186 = vst.msk [vmem:[%s255 + $0x40] sm:$0xff] %vm1177, 0.0
        %1187 = vst.msk [vmem:[%s255 + $0x48] sm:$0xff] %vm1177, 0.0
        %1188 = vst.msk [vmem:[%s255 + $0x50] sm:$0xff] %vm1177, 0.0
        %1189 = vst.msk [vmem:[%s255 + $0x58] sm:$0xff] %vm1177, 0.0
        %1190 = vst.msk [vmem:[%s255 + $0x60] sm:$0xff] %vm1177, 0.0
        %1191 = vst.msk [vmem:[%s255 + $0x68] sm:$0xff] %vm1177, 0.0
        %1192 = vst.msk [vmem:[%s255 + $0x70] sm:$0xff] %vm1177, 0.0
        %1193 = vst.msk [vmem:[%s255 + $0x78] sm:$0xff] %vm1177, 0.0
      $region40: #{tpu_custom_call.1} parent=35 // pred_fallthru
        _
      %s1194 = smul.u32 %s19, 128
      %s1195 = smul.u32 %s20, 384
      %s1196 = sadd.s32 %s1195, 384
      %p1197 = scmp.lt.s32.totalorder %s1194, %s1196
      %s1198 = sadd.s32 %s1194, 128
      %p1199 = scmp.lt.s32.totalorder %s1195, %s1198
      %p1200 = pnand %p1197, %p1199
      %p1201 = pneg %p1200
      // Predicated region
      $region41: #{tpu_custom_call.1} parent=35 // pred_check
        _
      $region42: #{tpu_custom_call.1} parent=35 // pred_check_branch
        %1203 = sbr.rel (%p1200) target = $region44
      $region43: #{tpu_custom_call.1} parent=35 // pred_region
        %v1204 = vlaneseq
        %v1205 = vshrl.u32 %v1204, 7
        %v1206 = vadd.s32 %v1205, 8
        %v1207 = vadd.s32 %v1205, 16
        %v1208 = vadd.s32 %v1205, 24
        %v1209 = vadd.s32 %v1205, 32
        %v1210 = vadd.s32 %v1205, 40
        %v1211 = vadd.s32 %v1205, 48
        %v1212 = vadd.s32 %v1205, 56
        %v1213 = vadd.s32 %v1205, 64
        %v1214 = vadd.s32 %v1205, 72
        %v1215 = vadd.s32 %v1205, 80
        %v1216 = vadd.s32 %v1205, 88
        %v1217 = vadd.s32 %v1205, 96
        %v1218 = vadd.s32 %v1205, 104
        %v1219 = vadd.s32 %v1205, 112
        %v1220 = vadd.s32 %v1205, 120
        %v1221 = vstv %s1194
        %v1222 = vadd.s32 %v1205, %v1221
        %v1223 = vadd.s32 %v1206, %v1221
        %v1224 = vadd.s32 %v1207, %v1221
        %v1225 = vadd.s32 %v1208, %v1221
        %v1226 = vadd.s32 %v1209, %v1221
        %v1227 = vadd.s32 %v1210, %v1221
        %v1228 = vadd.s32 %v1211, %v1221
        %v1229 = vadd.s32 %v1212, %v1221
        %v1230 = vadd.s32 %v1213, %v1221
        %v1231 = vadd.s32 %v1214, %v1221
        %v1232 = vadd.s32 %v1215, %v1221
        %v1233 = vadd.s32 %v1216, %v1221
        %v1234 = vadd.s32 %v1217, %v1221
        %v1235 = vadd.s32 %v1218, %v1221
        %v1236 = vadd.s32 %v1219, %v1221
        %v1237 = vadd.s32 %v1220, %v1221
        %v1238 = vlaneseq
        %v1239 = vand.u32 %v1238, 127
        %v1240 = vadd.s32 %v1239, 128
        %v1241 = vadd.s32 %v1239, 256
        %v1242 = vstv %s1195
        %v1243 = vadd.s32 %v1239, %v1242
        %v1244 = vadd.s32 %v1240, %v1242
        %v1245 = vadd.s32 %v1241, %v1242
        %vm1246 = vcmp.eq.s32.totalorder %v1222, %v1243
        %vm1247 = vcmp.eq.s32.totalorder %v1222, %v1244
        %vm1248 = vcmp.eq.s32.totalorder %v1222, %v1245
        %vm1249 = vcmp.eq.s32.totalorder %v1223, %v1243
        %vm1250 = vcmp.eq.s32.totalorder %v1223, %v1244
        %vm1251 = vcmp.eq.s32.totalorder %v1223, %v1245
        %vm1252 = vcmp.eq.s32.totalorder %v1224, %v1243
        %vm1253 = vcmp.eq.s32.totalorder %v1224, %v1244
        %vm1254 = vcmp.eq.s32.totalorder %v1224, %v1245
        %vm1255 = vcmp.eq.s32.totalorder %v1225, %v1243
        %vm1256 = vcmp.eq.s32.totalorder %v1225, %v1244
        %vm1257 = vcmp.eq.s32.totalorder %v1225, %v1245
        %vm1258 = vcmp.eq.s32.totalorder %v1226, %v1243
        %vm1259 = vcmp.eq.s32.totalorder %v1226, %v1244
        %vm1260 = vcmp.eq.s32.totalorder %v1226, %v1245
        %vm1261 = vcmp.eq.s32.totalorder %v1227, %v1243
        %vm1262 = vcmp.eq.s32.totalorder %v1227, %v1244
        %vm1263 = vcmp.eq.s32.totalorder %v1227, %v1245
        %vm1264 = vcmp.eq.s32.totalorder %v1228, %v1243
        %vm1265 = vcmp.eq.s32.totalorder %v1228, %v1244
        %vm1266 = vcmp.eq.s32.totalorder %v1228, %v1245
        %vm1267 = vcmp.eq.s32.totalorder %v1229, %v1243
        %vm1268 = vcmp.eq.s32.totalorder %v1229, %v1244
        %vm1269 = vcmp.eq.s32.totalorder %v1229, %v1245
        %vm1270 = vcmp.eq.s32.totalorder %v1230, %v1243
        %vm1271 = vcmp.eq.s32.totalorder %v1230, %v1244
        %vm1272 = vcmp.eq.s32.totalorder %v1230, %v1245
        %vm1273 = vcmp.eq.s32.totalorder %v1231, %v1243
        %vm1274 = vcmp.eq.s32.totalorder %v1231, %v1244
        %vm1275 = vcmp.eq.s32.totalorder %v1231, %v1245
        %vm1276 = vcmp.eq.s32.totalorder %v1232, %v1243
        %vm1277 = vcmp.eq.s32.totalorder %v1232, %v1244
        %vm1278 = vcmp.eq.s32.totalorder %v1232, %v1245
        %vm1279 = vcmp.eq.s32.totalorder %v1233, %v1243
        %vm1280 = vcmp.eq.s32.totalorder %v1233, %v1244
        %vm1281 = vcmp.eq.s32.totalorder %v1233, %v1245
        %vm1282 = vcmp.eq.s32.totalorder %v1234, %v1243
        %vm1283 = vcmp.eq.s32.totalorder %v1234, %v1244
        %vm1284 = vcmp.eq.s32.totalorder %v1234, %v1245
        %vm1285 = vcmp.eq.s32.totalorder %v1235, %v1243
        %vm1286 = vcmp.eq.s32.totalorder %v1235, %v1244
        %vm1287 = vcmp.eq.s32.totalorder %v1235, %v1245
        %vm1288 = vcmp.eq.s32.totalorder %v1236, %v1243
        %vm1289 = vcmp.eq.s32.totalorder %v1236, %v1244
        %vm1290 = vcmp.eq.s32.totalorder %v1236, %v1245
        %vm1291 = vcmp.eq.s32.totalorder %v1237, %v1243
        %vm1292 = vcmp.eq.s32.totalorder %v1237, %v1244
        %vm1293 = vcmp.eq.s32.totalorder %v1237, %v1245
        %v1294 = vsel %vm1246, 0.0, %v1125
        %v1295 = vsel %vm1247, 0.0, %v1126
        %v1296 = vsel %vm1248, 0.0, %v1127
        %v1297 = vsel %vm1249, 0.0, %v1128
        %v1298 = vsel %vm1250, 0.0, %v1129
        %v1299 = vsel %vm1251, 0.0, %v1130
        %v1300 = vsel %vm1252, 0.0, %v1131
        %v1301 = vsel %vm1253, 0.0, %v1132
        %v1302 = vsel %vm1254, 0.0, %v1133
        %v1303 = vsel %vm1255, 0.0, %v1134
        %v1304 = vsel %vm1256, 0.0, %v1135
        %v1305 = vsel %vm1257, 0.0, %v1136
        %v1306 = vsel %vm1258, 0.0, %v1137
        %v1307 = vsel %vm1259, 0.0, %v1138
        %v1308 = vsel %vm1260, 0.0, %v1139
        %v1309 = vsel %vm1261, 0.0, %v1140
        %v1310 = vsel %vm1262, 0.0, %v1141
        %v1311 = vsel %vm1263, 0.0, %v1142
        %v1312 = vsel %vm1264, 0.0, %v1143
        %v1313 = vsel %vm1265, 0.0, %v1144
        %v1314 = vsel %vm1266, 0.0, %v1145
        %v1315 = vsel %vm1267, 0.0, %v1146
        %v1316 = vsel %vm1268, 0.0, %v1147
        %v1317 = vsel %vm1269, 0.0, %v1148
        %v1318 = vsel %vm1270, 0.0, %v1149
        %v1319 = vsel %vm1271, 0.0, %v1150
        %v1320 = vsel %vm1272, 0.0, %v1151
        %v1321 = vsel %vm1273, 0.0, %v1152
        %v1322 = vsel %vm1274, 0.0, %v1153
        %v1323 = vsel %vm1275, 0.0, %v1154
        %v1324 = vsel %vm1276, 0.0, %v1155
        %v1325 = vsel %vm1277, 0.0, %v1156
        %v1326 = vsel %vm1278, 0.0, %v1157
        %v1327 = vsel %vm1279, 0.0, %v1158
        %v1328 = vsel %vm1280, 0.0, %v1159
        %v1329 = vsel %vm1281, 0.0, %v1160
        %v1330 = vsel %vm1282, 0.0, %v1161
        %v1331 = vsel %vm1283, 0.0, %v1162
        %v1332 = vsel %vm1284, 0.0, %v1163
        %v1333 = vsel %vm1285, 0.0, %v1164
        %v1334 = vsel %vm1286, 0.0, %v1165
        %v1335 = vsel %vm1287, 0.0, %v1166
        %v1336 = vsel %vm1288, 0.0, %v1167
        %v1337 = vsel %vm1289, 0.0, %v1168
        %v1338 = vsel %vm1290, 0.0, %v1169
        %v1339 = vsel %vm1291, 0.0, %v1170
        %v1340 = vsel %vm1292, 0.0, %v1171
        %v1341 = vsel %vm1293, 0.0, %v1172
        %v1342 = vld [vmem:[%s255] sm:$0xff]
        %v1343 = vld [vmem:[%s255 + $0x8] sm:$0xff]
        %v1344 = vld [vmem:[%s255 + $0x10] sm:$0xff]
        %v1345 = vld [vmem:[%s255 + $0x18] sm:$0xff]
        %v1346 = vld [vmem:[%s255 + $0x20] sm:$0xff]
        %v1347 = vld [vmem:[%s255 + $0x28] sm:$0xff]
        %v1348 = vld [vmem:[%s255 + $0x30] sm:$0xff]
        %v1349 = vld [vmem:[%s255 + $0x38] sm:$0xff]
        %v1350 = vld [vmem:[%s255 + $0x40] sm:$0xff]
        %v1351 = vld [vmem:[%s255 + $0x48] sm:$0xff]
        %v1352 = vld [vmem:[%s255 + $0x50] sm:$0xff]
        %v1353 = vld [vmem:[%s255 + $0x58] sm:$0xff]
        %v1354 = vld [vmem:[%s255 + $0x60] sm:$0xff]
        %v1355 = vld [vmem:[%s255 + $0x68] sm:$0xff]
        %v1356 = vld [vmem:[%s255 + $0x70] sm:$0xff]
        %v1357 = vld [vmem:[%s255 + $0x78] sm:$0xff]
        %v1358 = vadd.f32 %v1294, %v1295
        %v1359 = vadd.f32 %v1358, %v1296
        %1360 = vadd.xlane.f32.xlu0 %v1359
        %v1361 = vpop.xlane.xlu0 %1360
        %v1362 = vadd.f32 %v1297, %v1298
        %v1363 = vadd.f32 %v1362, %v1299
        %1364 = vadd.xlane.f32.xlu0 %v1363
        %v1365 = vpop.xlane.xlu0 %1364
        %v1366 = vadd.f32 %v1300, %v1301
        %v1367 = vadd.f32 %v1366, %v1302
        %1368 = vadd.xlane.f32.xlu0 %v1367
        %v1369 = vpop.xlane.xlu0 %1368
        %v1370 = vadd.f32 %v1303, %v1304
        %v1371 = vadd.f32 %v1370, %v1305
        %1372 = vadd.xlane.f32.xlu0 %v1371
        %v1373 = vpop.xlane.xlu0 %1372
        %v1374 = vadd.f32 %v1306, %v1307
        %v1375 = vadd.f32 %v1374, %v1308
        %1376 = vadd.xlane.f32.xlu0 %v1375
        %v1377 = vpop.xlane.xlu0 %1376
        %v1378 = vadd.f32 %v1309, %v1310
        %v1379 = vadd.f32 %v1378, %v1311
        %1380 = vadd.xlane.f32.xlu0 %v1379
        %v1381 = vpop.xlane.xlu0 %1380
        %v1382 = vadd.f32 %v1312, %v1313
        %v1383 = vadd.f32 %v1382, %v1314
        %1384 = vadd.xlane.f32.xlu0 %v1383
        %v1385 = vpop.xlane.xlu0 %1384
        %v1386 = vadd.f32 %v1315, %v1316
        %v1387 = vadd.f32 %v1386, %v1317
        %1388 = vadd.xlane.f32.xlu0 %v1387
        %v1389 = vpop.xlane.xlu0 %1388
        %v1390 = vadd.f32 %v1318, %v1319
        %v1391 = vadd.f32 %v1390, %v1320
        %1392 = vadd.xlane.f32.xlu0 %v1391
        %v1393 = vpop.xlane.xlu0 %1392
        %v1394 = vadd.f32 %v1321, %v1322
        %v1395 = vadd.f32 %v1394, %v1323
        %1396 = vadd.xlane.f32.xlu0 %v1395
        %v1397 = vpop.xlane.xlu0 %1396
        %v1398 = vadd.f32 %v1324, %v1325
        %v1399 = vadd.f32 %v1398, %v1326
        %1400 = vadd.xlane.f32.xlu0 %v1399
        %v1401 = vpop.xlane.xlu0 %1400
        %v1402 = vadd.f32 %v1327, %v1328
        %v1403 = vadd.f32 %v1402, %v1329
        %1404 = vadd.xlane.f32.xlu0 %v1403
        %v1405 = vpop.xlane.xlu0 %1404
        %v1406 = vadd.f32 %v1330, %v1331
        %v1407 = vadd.f32 %v1406, %v1332
        %1408 = vadd.xlane.f32.xlu0 %v1407
        %v1409 = vpop.xlane.xlu0 %1408
        %v1410 = vadd.f32 %v1333, %v1334
        %v1411 = vadd.f32 %v1410, %v1335
        %1412 = vadd.xlane.f32.xlu0 %v1411
        %v1413 = vpop.xlane.xlu0 %1412
        %v1414 = vadd.f32 %v1336, %v1337
        %v1415 = vadd.f32 %v1414, %v1338
        %1416 = vadd.xlane.f32.xlu0 %v1415
        %v1417 = vpop.xlane.xlu0 %1416
        %v1418 = vadd.f32 %v1339, %v1340
        %v1419 = vadd.f32 %v1418, %v1341
        %1420 = vadd.xlane.f32.xlu0 %v1419
        %v1421 = vpop.xlane.xlu0 %1420
        %v1422 = vadd.f32 %v1342, %v1361
        %v1423 = vadd.f32 %v1343, %v1365
        %v1424 = vadd.f32 %v1344, %v1369
        %v1425 = vadd.f32 %v1345, %v1373
        %v1426 = vadd.f32 %v1346, %v1377
        %v1427 = vadd.f32 %v1347, %v1381
        %v1428 = vadd.f32 %v1348, %v1385
        %v1429 = vadd.f32 %v1349, %v1389
        %v1430 = vadd.f32 %v1350, %v1393
        %v1431 = vadd.f32 %v1351, %v1397
        %v1432 = vadd.f32 %v1352, %v1401
        %v1433 = vadd.f32 %v1353, %v1405
        %v1434 = vadd.f32 %v1354, %v1409
        %v1435 = vadd.f32 %v1355, %v1413
        %v1436 = vadd.f32 %v1356, %v1417
        %v1437 = vadd.f32 %v1357, %v1421
        %vm1438 = vcmask 7168
        %1439 = vst.msk [vmem:[%s255] sm:$0xff] %vm1438, %v1422
        %1440 = vst.msk [vmem:[%s255 + $0x8] sm:$0xff] %vm1438, %v1423
        %1441 = vst.msk [vmem:[%s255 + $0x10] sm:$0xff] %vm1438, %v1424
        %1442 = vst.msk [vmem:[%s255 + $0x18] sm:$0xff] %vm1438, %v1425
        %1443 = vst.msk [vmem:[%s255 + $0x20] sm:$0xff] %vm1438, %v1426
        %1444 = vst.msk [vmem:[%s255 + $0x28] sm:$0xff] %vm1438, %v1427
        %1445 = vst.msk [vmem:[%s255 + $0x30] sm:$0xff] %vm1438, %v1428
        %1446 = vst.msk [vmem:[%s255 + $0x38] sm:$0xff] %vm1438, %v1429
        %1447 = vst.msk [vmem:[%s255 + $0x40] sm:$0xff] %vm1438, %v1430
        %1448 = vst.msk [vmem:[%s255 + $0x48] sm:$0xff] %vm1438, %v1431
        %1449 = vst.msk [vmem:[%s255 + $0x50] sm:$0xff] %vm1438, %v1432
        %1450 = vst.msk [vmem:[%s255 + $0x58] sm:$0xff] %vm1438, %v1433
        %1451 = vst.msk [vmem:[%s255 + $0x60] sm:$0xff] %vm1438, %v1434
        %1452 = vst.msk [vmem:[%s255 + $0x68] sm:$0xff] %vm1438, %v1435
        %1453 = vst.msk [vmem:[%s255 + $0x70] sm:$0xff] %vm1438, %v1436
        %1454 = vst.msk [vmem:[%s255 + $0x78] sm:$0xff] %vm1438, %v1437
      $region44: #{tpu_custom_call.1} parent=35 // pred_fallthru
        _
      %p1455 = pneg %p1201
      // Predicated region
      $region45: #{tpu_custom_call.1} parent=35 // pred_check
        _
      $region46: #{tpu_custom_call.1} parent=35 // pred_check_branch
        %1457 = sbr.rel (%p1201) target = $region48
      $region47: #{tpu_custom_call.1} parent=35 // pred_region
        %v1458 = vld [vmem:[%s255] sm:$0xff]
        %v1459 = vld [vmem:[%s255 + $0x8] sm:$0xff]
        %v1460 = vld [vmem:[%s255 + $0x10] sm:$0xff]
        %v1461 = vld [vmem:[%s255 + $0x18] sm:$0xff]
        %v1462 = vld [vmem:[%s255 + $0x20] sm:$0xff]
        %v1463 = vld [vmem:[%s255 + $0x28] sm:$0xff]
        %v1464 = vld [vmem:[%s255 + $0x30] sm:$0xff]
        %v1465 = vld [vmem:[%s255 + $0x38] sm:$0xff]
        %v1466 = vld [vmem:[%s255 + $0x40] sm:$0xff]
        %v1467 = vld [vmem:[%s255 + $0x48] sm:$0xff]
        %v1468 = vld [vmem:[%s255 + $0x50] sm:$0xff]
        %v1469 = vld [vmem:[%s255 + $0x58] sm:$0xff]
        %v1470 = vld [vmem:[%s255 + $0x60] sm:$0xff]
        %v1471 = vld [vmem:[%s255 + $0x68] sm:$0xff]
        %v1472 = vld [vmem:[%s255 + $0x70] sm:$0xff]
        %v1473 = vld [vmem:[%s255 + $0x78] sm:$0xff]
        %v1474 = vadd.f32 %v1125, %v1126
        %v1475 = vadd.f32 %v1474, %v1127
        %1476 = vadd.xlane.f32.xlu0 %v1475
        %v1477 = vpop.xlane.xlu0 %1476
        %v1478 = vadd.f32 %v1128, %v1129
        %v1479 = vadd.f32 %v1478, %v1130
        %1480 = vadd.xlane.f32.xlu0 %v1479
        %v1481 = vpop.xlane.xlu0 %1480
        %v1482 = vadd.f32 %v1131, %v1132
        %v1483 = vadd.f32 %v1482, %v1133
        %1484 = vadd.xlane.f32.xlu0 %v1483
        %v1485 = vpop.xlane.xlu0 %1484
        %v1486 = vadd.f32 %v1134, %v1135
        %v1487 = vadd.f32 %v1486, %v1136
        %1488 = vadd.xlane.f32.xlu0 %v1487
        %v1489 = vpop.xlane.xlu0 %1488
        %v1490 = vadd.f32 %v1137, %v1138
        %v1491 = vadd.f32 %v1490, %v1139
        %1492 = vadd.xlane.f32.xlu0 %v1491
        %v1493 = vpop.xlane.xlu0 %1492
        %v1494 = vadd.f32 %v1140, %v1141
        %v1495 = vadd.f32 %v1494, %v1142
        %1496 = vadd.xlane.f32.xlu0 %v1495
        %v1497 = vpop.xlane.xlu0 %1496
        %v1498 = vadd.f32 %v1143, %v1144
        %v1499 = vadd.f32 %v1498, %v1145
        %1500 = vadd.xlane.f32.xlu0 %v1499
        %v1501 = vpop.xlane.xlu0 %1500
        %v1502 = vadd.f32 %v1146, %v1147
        %v1503 = vadd.f32 %v1502, %v1148
        %1504 = vadd.xlane.f32.xlu0 %v1503
        %v1505 = vpop.xlane.xlu0 %1504
        %v1506 = vadd.f32 %v1149, %v1150
        %v1507 = vadd.f32 %v1506, %v1151
        %1508 = vadd.xlane.f32.xlu0 %v1507
        %v1509 = vpop.xlane.xlu0 %1508
        %v1510 = vadd.f32 %v1152, %v1153
        %v1511 = vadd.f32 %v1510, %v1154
        %1512 = vadd.xlane.f32.xlu0 %v1511
        %v1513 = vpop.xlane.xlu0 %1512
        %v1514 = vadd.f32 %v1155, %v1156
        %v1515 = vadd.f32 %v1514, %v1157
        %1516 = vadd.xlane.f32.xlu0 %v1515
        %v1517 = vpop.xlane.xlu0 %1516
        %v1518 = vadd.f32 %v1158, %v1159
        %v1519 = vadd.f32 %v1518, %v1160
        %1520 = vadd.xlane.f32.xlu0 %v1519
        %v1521 = vpop.xlane.xlu0 %1520
        %v1522 = vadd.f32 %v1161, %v1162
        %v1523 = vadd.f32 %v1522, %v1163
        %1524 = vadd.xlane.f32.xlu0 %v1523
        %v1525 = vpop.xlane.xlu0 %1524
        %v1526 = vadd.f32 %v1164, %v1165
        %v1527 = vadd.f32 %v1526, %v1166
        %1528 = vadd.xlane.f32.xlu0 %v1527
        %v1529 = vpop.xlane.xlu0 %1528
        %v1530 = vadd.f32 %v1167, %v1168
        %v1531 = vadd.f32 %v1530, %v1169
        %1532 = vadd.xlane.f32.xlu0 %v1531
        %v1533 = vpop.xlane.xlu0 %1532
        %v1534 = vadd.f32 %v1170, %v1171
        %v1535 = vadd.f32 %v1534, %v1172
        %1536 = vadd.xlane.f32.xlu0 %v1535
        %v1537 = vpop.xlane.xlu0 %1536
        %v1538 = vadd.f32 %v1458, %v1477
        %v1539 = vadd.f32 %v1459, %v1481
        %v1540 = vadd.f32 %v1460, %v1485
        %v1541 = vadd.f32 %v1461, %v1489
        %v1542 = vadd.f32 %v1462, %v1493
        %v1543 = vadd.f32 %v1463, %v1497
        %v1544 = vadd.f32 %v1464, %v1501
        %v1545 = vadd.f32 %v1465, %v1505
        %v1546 = vadd.f32 %v1466, %v1509
        %v1547 = vadd.f32 %v1467, %v1513
        %v1548 = vadd.f32 %v1468, %v1517
        %v1549 = vadd.f32 %v1469, %v1521
        %v1550 = vadd.f32 %v1470, %v1525
        %v1551 = vadd.f32 %v1471, %v1529
        %v1552 = vadd.f32 %v1472, %v1533
        %v1553 = vadd.f32 %v1473, %v1537
        %vm1554 = vcmask 7168
        %1555 = vst.msk [vmem:[%s255] sm:$0xff] %vm1554, %v1538
        %1556 = vst.msk [vmem:[%s255 + $0x8] sm:$0xff] %vm1554, %v1539
        %1557 = vst.msk [vmem:[%s255 + $0x10] sm:$0xff] %vm1554, %v1540
        %1558 = vst.msk [vmem:[%s255 + $0x18] sm:$0xff] %vm1554, %v1541
        %1559 = vst.msk [vmem:[%s255 + $0x20] sm:$0xff] %vm1554, %v1542
        %1560 = vst.msk [vmem:[%s255 + $0x28] sm:$0xff] %vm1554, %v1543
        %1561 = vst.msk [vmem:[%s255 + $0x30] sm:$0xff] %vm1554, %v1544
        %1562 = vst.msk [vmem:[%s255 + $0x38] sm:$0xff] %vm1554, %v1545
        %1563 = vst.msk [vmem:[%s255 + $0x40] sm:$0xff] %vm1554, %v1546
        %1564 = vst.msk [vmem:[%s255 + $0x48] sm:$0xff] %vm1554, %v1547
        %1565 = vst.msk [vmem:[%s255 + $0x50] sm:$0xff] %vm1554, %v1548
        %1566 = vst.msk [vmem:[%s255 + $0x58] sm:$0xff] %vm1554, %v1549
        %1567 = vst.msk [vmem:[%s255 + $0x60] sm:$0xff] %vm1554, %v1550
        %1568 = vst.msk [vmem:[%s255 + $0x68] sm:$0xff] %vm1554, %v1551
        %1569 = vst.msk [vmem:[%s255 + $0x70] sm:$0xff] %vm1554, %v1552
        %1570 = vst.msk [vmem:[%s255 + $0x78] sm:$0xff] %vm1554, %v1553
      $region48: #{tpu_custom_call.1} parent=35 // pred_fallthru
        _
      %s1571 = smul.u32 16, %s19
      %p1572 = scmp.lt.s32.totalorder %s1571, 47
      %s1573 = scalar_select %p1572, %s1571, 47
      %s1574 = smul.addr %s1573, 8
      %s1575 = scalar_lea.vmem %s4, %s1574
      // Predicated region
      $region49: #{tpu_custom_call.1} parent=35 // pred_check
        %p1576 = pneg %p144
      $region50: #{tpu_custom_call.1} parent=35 // pred_check_branch
        %1578 = sbr.rel (%p1576) target = $region52
      $region51: #{tpu_custom_call.1} parent=35 // pred_region
        %s1579 = smul.u32 16, %s19
      $region52: #{tpu_custom_call.1} parent=35 // pred_fallthru
        _
    $region36: #{tpu_custom_call.1} parent=5 // pred_fallthru
      _
    %p1580 = scmp.le.s32.totalorder 2, %s10
    // Predicated region
    $region53: #{tpu_custom_call.1} parent=5 // pred_check
      %p1581 = pneg %p1580
    $region54: #{tpu_custom_call.1} parent=5 // pred_check_branch
      %1583 = sbr.rel (%p1581) target = $region56
    $region55: #{tpu_custom_call.1} parent=5 // pred_region
      %s1584 = ssub.s32 %s10, 2
      // Predicated region
      $region57: #{tpu_custom_call.1} parent=55 // pred_check
        %p1585 = pneg %p150
      $region58: #{tpu_custom_call.1} parent=55 // pred_check_branch
        %1587 = sbr.rel (%p1585) target = $region60
      $region59: #{tpu_custom_call.1} parent=55 // pred_region
        %s1588 = smul.u32 16, %s21
        %p1589 = scmp.lt.s32.totalorder %s1588, 47
        %s1590 = scalar_select %p1589, %s1588, 47
        %s1591 = smul.addr %s1590, 8
        %s1592 = scalar_lea.vmem %s4, %s1591
      $region60: #{tpu_custom_call.1} parent=55 // pred_fallthru
        _
    $region56: #{tpu_custom_call.1} parent=5 // pred_fallthru
      _
  $region6: #{tpu_custom_call.1} parent=0 // loop_footer
    %s14 = sadd.s32 1, %s10
  $region7: #{tpu_custom_call.1} parent=0 // loop_footer_branch
    %9 = sbr.rel target = $region3
  $region8: #{tpu_custom_call.1} parent=0 // loop_exit
    _

</llo_original>
